<compile_context>
chip_gen: v6e
topology: v6e:2x2x1
jax: 0.10.0
libtpu: 0.0.40
codegen_flags: <defaults>
</compile_context>

<pallas_src>
import functools

import jax
import jax.numpy as jnp
import numpy as np
from jax.experimental import pallas as pl
from jax.experimental.pallas import tpu as pltpu

LANE = 128
SUB = 8
NEG = -1e30  # masks padded softmax lanes (exp -> 0, no NaN)


def _round_up(x, m):
    return ((x + m - 1) // m) * m


def _pad2d(x, rows, cols, fill=0.0):
    r, c = x.shape
    return jnp.pad(x, ((0, rows - r), (0, cols - c)), constant_values=fill)


# ----------------------------------------------------------------------------
# Kernel
# ----------------------------------------------------------------------------
def _decoder_kernel(nm_p, ng_p,
                    z_ref, glib_ref, w1_ref, b1_ref, wh_ref, bh_ref,
                    px_scale_ref, g_ref, px_dropout_ref):
    # ---- FCLayers: Linear + ReLU (dropout_rate=0, no batch norm, n_layers=1) ----
    h = jnp.dot(z_ref[...], w1_ref[...], preferred_element_type=jnp.float32)
    h = jnp.maximum(h + b1_ref[...], 0.0)
    h = h.astype(wh_ref.dtype)            # bf16 path feeds the MXU in bf16

    # ---- fused heads: one wide MXU matmul, then 128-aligned static slices ----
    # Column order: [scale (nm_p) | geneset (ng_p) | dropout (rest)]
    logits = jnp.dot(h, wh_ref[...], preferred_element_type=jnp.float32) + bh_ref[...]
    logit_s = logits[:, :nm_p]
    logit_g = logits[:, nm_p:nm_p + ng_p]
    logit_d = logits[:, nm_p + ng_p:]

    def _softmax(x):
        m = jnp.max(x, axis=-1, keepdims=True)
        e = jnp.exp(x - m)
        inv = pl.reciprocal(jnp.sum(e, axis=-1, keepdims=True), approx=False)
        return e * inv

    px_scale_ref[...] = _softmax(logit_s)                 # padded lanes: bias -1e30 -> 0
    g_ref[...] = jnp.exp(glib_ref[...]) * _softmax(logit_g)
    px_dropout_ref[...] = logit_d


# ----------------------------------------------------------------------------
# One-time weight preparation (cache the result across forward calls)
# ----------------------------------------------------------------------------
def prepare_decoder_params(params, geneset_len, param_dtype=jnp.bfloat16):
    """Pad / fuse / cast decoder weights once; reuse the result for every forward."""
    assert geneset_len > 0  # TODO(synk): geneset_len == 0 branch (g = 0, no concat) not implemented.
    n_input, n_hidden = params["w1"].shape
    n_main = params["ws"].shape[1]
    n_output = params["wd"].shape[1]
    assert params["wg"].shape[1] == geneset_len
    assert n_output == n_main + geneset_len

    Ki = _round_up(n_input, LANE)
    Kh = _round_up(n_hidden, LANE)
    Nm = _round_up(n_main, LANE)
    Ng = _round_up(geneset_len, LANE)
    No = _round_up(n_output, LANE)
    Nf = Nm + Ng + No

    f32 = jnp.float32
    w1 = _pad2d(params["w1"].astype(f32), Ki, Kh).astype(param_dtype)
    b1 = _pad2d(params["b1"].astype(f32).reshape(1, -1), 1, Kh)                 # f32 bias
    ws = _pad2d(params["ws"].astype(f32), Kh, Nm)
    wg = _pad2d(params["wg"].astype(f32), Kh, Ng)
    wd = _pad2d(params["wd"].astype(f32), Kh, No)
    w_heads = jnp.concatenate([ws, wg, wd], axis=1).astype(param_dtype)         # (Kh, Nf)
    bs = _pad2d(params["bs"].astype(f32).reshape(1, -1), 1, Nm, fill=NEG)
    bg = _pad2d(params["bg"].astype(f32).reshape(1, -1), 1, Ng, fill=NEG)
    bd = _pad2d(params["bd"].astype(f32).reshape(1, -1), 1, No, fill=0.0)
    b_heads = jnp.concatenate([bs, bg, bd], axis=1)                             # f32 (1, Nf)

    dims = dict(n_input=n_input, n_hidden=n_hidden, n_main=n_main,
                n_output=n_output, geneset_len=geneset_len,
                Ki=Ki, Kh=Kh, Nm=Nm, Ng=Ng, No=No, Nf=Nf)
    return {"w1": w1, "b1": b1, "w_heads": w_heads, "b_heads": b_heads,
            "param_dtype": param_dtype, "dims": dims}


def _vmem_bytes(tb, d, psize, weight_copies):
    """Rough VMEM footprint: resident weights + double-buffered batch tiles +
    in-kernel intermediates (h, logits, softmax temporaries)."""
    weights = weight_copies * ((d["Ki"] * d["Kh"] + d["Kh"] * d["Nf"]) * psize
                               + (d["Kh"] + d["Nf"]) * 4)
    ins = 2 * tb * (d["Ki"] * psize + LANE * 4)             # z + glibrary (lane-padded col)
    outs = 2 * tb * (d["Nm"] + d["Ng"] + d["No"]) * 4       # f32 outputs
    interm = tb * (d["Kh"] + d["Nf"] + d["Nm"] + d["Ng"]) * 4
    return weights + ins + outs + 2 * interm                # 2x slack on intermediates


# ----------------------------------------------------------------------------
# Forward wrapper
# ----------------------------------------------------------------------------
def my_decoder_forward(z, library, glibrary, params, geneset_len, *,
                       param_dtype=jnp.bfloat16, batch_tile=None):
    """myDecoder forward. Returns (px_scale, px_r=None, px_rate, px_dropout, g).

    `params` may be either the raw weight dict or the cached output of
    prepare_decoder_params (preferred: avoids per-call weight padding traffic).
    """
    if "w_heads" not in params:
        params = prepare_decoder_params(params, geneset_len, param_dtype)
    prep = params
    d = prep["dims"]
    assert d["geneset_len"] == geneset_len
    pdt = prep["param_dtype"]
    psize = jnp.dtype(pdt).itemsize
    B = z.shape[0]

    # --- VMEM ceiling: stay well under the chip's physical VMEM (64 MiB on v7x) ---
    try:
        vmem_cap = int(pltpu.get_tpu_info().vmem_capacity_bytes)
    except Exception:
        vmem_cap = 64 << 20                      # conservative (v7x-sized) fallback
    ceiling = max(vmem_cap - (12 << 20), 16 << 20)

    # --- batch tile: large for HBM roofline, but >= 2 grid steps so a v7x megacore
    #     can split the "parallel" batch axis; shrink until VMEM estimate fits. ---
    if batch_tile is None:
        half = _round_up(max(-(-B // 2), SUB), SUB)
        TB = _round_up(min(512, max(half, SUB)), SUB)
    else:
        TB = _round_up(batch_tile, SUB)
    while TB > SUB and _vmem_bytes(TB, d, psize, 2) > ceiling:
        TB = _round_up(max(TB // 2, SUB), SUB)
    # TODO(synk): for gene-scale n_output where even TB=8 exceeds VMEM, add a second
    # grid axis over the fused head dimension and stream weight column blocks.

    Bp = _round_up(B, TB)
    num_tiles = Bp // TB
    vmem_limit = int(min(ceiling, max(_vmem_bytes(TB, d, psize, 2) + (4 << 20), 32 << 20)))

    # --- batch-dependent inputs only (weights are prepared/cached above) ---
    zp = _pad2d(z.astype(jnp.float32), Bp, d["Ki"]).astype(pdt)
    glibp = _pad2d(glibrary.astype(jnp.float32), Bp, 1)

    kernel = functools.partial(_decoder_kernel, d["Nm"], d["Ng"])
    out_shape = (
        jax.ShapeDtypeStruct((Bp, d["Nm"]), jnp.float32),   # px_scale
        jax.ShapeDtypeStruct((Bp, d["Ng"]), jnp.float32),   # g
        jax.ShapeDtypeStruct((Bp, d["No"]), jnp.float32),   # px_dropout
    )

    def _run(single_buffer_weights):
        if single_buffer_weights:
            def wspec(shape):
                return pl.BlockSpec(shape, lambda i: (0, 0),
                                    pipeline_mode=pl.Buffered(1))
        else:
            def wspec(shape):
                return pl.BlockSpec(shape, lambda i: (0, 0))

        grid_spec = pltpu.PrefetchScalarGridSpec(
            num_scalar_prefetch=0,
            grid=(num_tiles,),
            in_specs=[
                pl.BlockSpec((TB, d["Ki"]), lambda i: (i, 0)),   # z        (batch-tiled)
                pl.BlockSpec((TB, 1), lambda i: (i, 0)),         # glibrary (batch-tiled)
                wspec((d["Ki"], d["Kh"])),                       # W1       (resident)
                wspec((1, d["Kh"])),                             # b1
                wspec((d["Kh"], d["Nf"])),                       # fused head weights
                wspec((1, d["Nf"])),                             # fused head biases
            ],
            out_specs=[
                pl.BlockSpec((TB, d["Nm"]), lambda i: (i, 0)),   # px_scale
                pl.BlockSpec((TB, d["Ng"]), lambda i: (i, 0)),   # g
                pl.BlockSpec((TB, d["No"]), lambda i: (i, 0)),   # px_dropout
            ],
        )
        out = pl.pallas_call(
            kernel,
            grid_spec=grid_spec,
            out_shape=out_shape,
            compiler_params=pltpu.CompilerParams(
                dimension_semantics=("parallel",),
                vmem_limit_bytes=vmem_limit,
            ),
        )(zp, glibp, prep["w1"], prep["b1"], prep["w_heads"], prep["b_heads"])
        jax.block_until_ready(out)
        return out

    try:
        out = _run(True)      # single-buffered resident weights (halves weight VMEM)
    except Exception:
        out = _run(False)     # fall back to default double-buffering

    px_scale_p, g_p, px_dropout_p = out
    n_main, n_output, gs = d["n_main"], d["n_output"], d["geneset_len"]
    px_scale = px_scale_p[:B, :n_main]
    g = g_p[:B, :gs]
    px_dropout = px_dropout_p[:B, :n_output]
    # px_rate assembled here: exp(library)*px_scale fuses into the concat; the kernel
    # no longer writes a duplicate Nm-wide px_rate slab (saves one f32 writeback).
    px_rate = jnp.concatenate([jnp.exp(library) * px_scale, g], axis=1)
    px_r = None
    return px_scale, px_r, px_rate, px_dropout, g


# ----------------------------------------------------------------------------
# Pure-JAX reference + synthetic params + test
# ----------------------------------------------------------------------------
def _reference_forward(z, library, glibrary, params):
    hp = jax.lax.Precision.HIGHEST
    h = jnp.maximum(jnp.dot(z, params["w1"], precision=hp) + params["b1"], 0.0)
    px_scale = jax.nn.softmax(jnp.dot(h, params["ws"], precision=hp) + params["bs"], axis=-1)
    px_dropout = jnp.dot(h, params["wd"], precision=hp) + params["bd"]
    g_scale = jax.nn.softmax(jnp.dot(h, params["wg"], precision=hp) + params["bg"], axis=-1)
    g = jnp.exp(glibrary) * g_scale
    px_rate = jnp.concatenate([jnp.exp(library) * px_scale, g], axis=1)
    return px_scale, px_rate, px_dropout, g


def _init_params(key, n_input, n_hidden, n_output, geneset_len):
    """Deterministic synthetic parameters (PyTorch-like uniform Linear init)."""
    n_main = n_output - geneset_len
    ks = jax.random.split(key, 8)

    def lin(kw, kb, fan_in, fan_out):
        bound = 1.0 / np.sqrt(fan_in)
        w = jax.random.uniform(kw, (fan_in, fan_out), jnp.float32, -bound, bound)
        b = jax.random.uniform(kb, (1, fan_out), jnp.float32, -bound, bound)
        return w, b

    w1, b1 = lin(ks[0], ks[1], n_input, n_hidden)
    ws, bs = lin(ks[2], ks[3], n_hidden, n_main)
    wd, bd = lin(ks[4], ks[5], n_hidden, n_output)
    wg, bg = lin(ks[6], ks[7], n_hidden, geneset_len)
    return {"w1": w1, "b1": b1, "ws": ws, "bs": bs,
            "wd": wd, "bd": bd, "wg": wg, "bg": bg}


if __name__ == "__main__":
    B, n_input, n_hidden, n_output, geneset_len = 16, 10, 32, 40, 8

    key = jax.random.PRNGKey(0)
    k_z, k_l, k_g, k_p = jax.random.split(key, 4)
    z = jax.random.normal(k_z, (B, n_input), jnp.float32)
    library = jax.random.normal(k_l, (B, 1), jnp.float32)      # log library size
    glibrary = jax.random.normal(k_g, (B, 1), jnp.float32)     # log geneset score sum
    params = _init_params(k_p, n_input, n_hidden, n_output, geneset_len)

    ref_scale, ref_rate, ref_dropout, ref_g = _reference_forward(z, library, glibrary, params)

    # --- f32 weights (prepared once, reused) ---
    prep_f32 = prepare_decoder_params(params, geneset_len, param_dtype=jnp.float32)
    px_scale, px_r, px_rate, px_dropout, g = my_decoder_forward(
        z, library, glibrary, prep_f32, geneset_len)
    jax.block_until_ready((px_scale, px_rate, px_dropout, g))
    assert px_r is None

    np.testing.assert_allclose(np.asarray(px_dropout), np.asarray(ref_dropout),
                               rtol=1e-2, atol=1e-2)
    np.testing.assert_allclose(np.asarray(px_scale), np.asarray(ref_scale),
                               rtol=1e-2, atol=1e-4)
    np.testing.assert_allclose(np.asarray(px_rate), np.asarray(ref_rate),
                               rtol=1e-2, atol=1e-4)
    np.testing.assert_allclose(np.asarray(g), np.asarray(ref_g),
                               rtol=1e-2, atol=1e-4)

    # --- default bf16 weights/activations (MXU-native path; loose tolerance) ---
    prep_bf16 = prepare_decoder_params(params, geneset_len)    # default bfloat16
    bscale, _, brate, bdropout, bg_ = my_decoder_forward(
        z, library, glibrary, prep_bf16, geneset_len)
    jax.block_until_ready((bscale, brate, bdropout, bg_))
    np.testing.assert_allclose(np.asarray(bscale), np.asarray(ref_scale), rtol=1e-1, atol=1e-2)
    np.testing.assert_allclose(np.asarray(brate), np.asarray(ref_rate), rtol=1e-1, atol=1e-2)
    np.testing.assert_allclose(np.asarray(bdropout), np.asarray(ref_dropout), rtol=1e-1, atol=1e-2)
    np.testing.assert_allclose(np.asarray(bg_), np.asarray(ref_g), rtol=1e-1, atol=1e-2)

    print("KERNEL_OK")
</pallas_src>

<mosaic_0001>
module attributes {stable_mosaic.version = 11 : i64} {
  func.func @_decoder_kernel(%arg0: i32, %arg1: memref<8x128xf32, #tpu.memory_space<vmem>>, %arg2: memref<8x1xf32, #tpu.memory_space<vmem>>, %arg3: memref<128x128xf32, #tpu.memory_space<vmem>>, %arg4: memref<1x128xf32, #tpu.memory_space<vmem>>, %arg5: memref<128x384xf32, #tpu.memory_space<vmem>>, %arg6: memref<1x384xf32, #tpu.memory_space<vmem>>, %arg7: memref<8x128xf32, #tpu.memory_space<vmem>>, %arg8: memref<8x128xf32, #tpu.memory_space<vmem>>, %arg9: memref<8x128xf32, #tpu.memory_space<vmem>>) attributes {dimension_semantics = [#tpu.dimension_semantics<parallel>], iteration_bounds = array<i64: 2>, scalar_prefetch = 0 : i64, scratch_operands = 0 : i64, tpu.core_type = #tpu.core_type<tc>, window_params = [{transform_indices = @transform_0, window_bounds = array<i64: 8, 128>}, {transform_indices = @transform_1, window_bounds = array<i64: 8, 1>}, {pipeline_mode = #tpu.pipeline_mode<synchronous>, transform_indices = @transform_2, window_bounds = array<i64: 128, 128>}, {pipeline_mode = #tpu.pipeline_mode<synchronous>, transform_indices = @transform_3, window_bounds = array<i64: 1, 128>}, {pipeline_mode = #tpu.pipeline_mode<synchronous>, transform_indices = @transform_4, window_bounds = array<i64: 128, 384>}, {pipeline_mode = #tpu.pipeline_mode<synchronous>, transform_indices = @transform_5, window_bounds = array<i64: 1, 384>}, {transform_indices = @transform_6, window_bounds = array<i64: 8, 128>}, {transform_indices = @transform_7, window_bounds = array<i64: 8, 128>}, {transform_indices = @transform_8, window_bounds = array<i64: 8, 128>}]} {
    %c0 = arith.constant 0 : index
    %c0_0 = arith.constant 0 : index
    %0 = vector.load %arg1[%c0, %c0_0] : memref<8x128xf32, #tpu.memory_space<vmem>>, vector<8x128xf32>
    %c0_1 = arith.constant 0 : index
    %c0_2 = arith.constant 0 : index
    %1 = vector.load %arg3[%c0_1, %c0_2] : memref<128x128xf32, #tpu.memory_space<vmem>>, vector<128x128xf32>
    %cst = arith.constant dense<0.000000e+00> : vector<8x128xf32>
    %2 = tpu.matmul %0, %1, %cst {dimension_numbers = #tpu.dot_dimension_numbers<[1], [0], [0], [1], [0, 0, 1, 1], [], []>} : vector<8x128xf32>, vector<128x128xf32>, vector<8x128xf32> -> vector<8x128xf32>
    %c0_3 = arith.constant 0 : index
    %c0_4 = arith.constant 0 : index
    %3 = vector.load %arg4[%c0_3, %c0_4] : memref<1x128xf32, #tpu.memory_space<vmem>>, vector<1x128xf32>
    %4 = vector.broadcast %3 : vector<1x128xf32> to vector<8x128xf32>
    %5 = arith.addf %2, %4 : vector<8x128xf32>
    %cst_5 = arith.constant 0.000000e+00 : f32
    %6 = vector.broadcast %cst_5 : f32 to vector<8x128xf32>
    %7 = arith.maximumf %5, %6 : vector<8x128xf32>
    %c0_6 = arith.constant 0 : index
    %c0_7 = arith.constant 0 : index
    %8 = vector.load %arg5[%c0_6, %c0_7] : memref<128x384xf32, #tpu.memory_space<vmem>>, vector<128x384xf32>
    %cst_8 = arith.constant dense<0.000000e+00> : vector<8x384xf32>
    %9 = tpu.matmul %7, %8, %cst_8 {dimension_numbers = #tpu.dot_dimension_numbers<[1], [0], [0], [1], [0, 0, 1, 1], [], []>} : vector<8x128xf32>, vector<128x384xf32>, vector<8x384xf32> -> vector<8x384xf32>
    %c0_9 = arith.constant 0 : index
    %c0_10 = arith.constant 0 : index
    %10 = vector.load %arg6[%c0_9, %c0_10] : memref<1x384xf32, #tpu.memory_space<vmem>>, vector<1x384xf32>
    %11 = vector.broadcast %10 : vector<1x384xf32> to vector<8x384xf32>
    %12 = arith.addf %9, %11 : vector<8x384xf32>
    %13 = vector.extract_strided_slice %12 {offsets = [0, 0], sizes = [8, 128], strides = [1, 1]} : vector<8x384xf32> to vector<8x128xf32>
    %14 = vector.extract_strided_slice %12 {offsets = [0, 128], sizes = [8, 128], strides = [1, 1]} : vector<8x384xf32> to vector<8x128xf32>
    %15 = vector.extract_strided_slice %12 {offsets = [0, 256], sizes = [8, 128], strides = [1, 1]} : vector<8x384xf32> to vector<8x128xf32>
    %cst_11 = arith.constant dense<0xFF800000> : vector<8xf32>
    %16 = vector.multi_reduction <maximumf>, %13, %cst_11 [1] : vector<8x128xf32> to vector<8xf32>
    %17 = vector.shape_cast %16 : vector<8xf32> to vector<8x1xf32>
    %18 = vector.broadcast %17 : vector<8x1xf32> to vector<8x128xf32>
    %19 = arith.subf %13, %18 : vector<8x128xf32>
    %20 = math.exp %19 : vector<8x128xf32>
    %cst_12 = arith.constant dense<0.000000e+00> : vector<8xf32>
    %21 = vector.multi_reduction <add>, %20, %cst_12 [1] : vector<8x128xf32> to vector<8xf32>
    %22 = vector.shape_cast %21 : vector<8xf32> to vector<8x1xf32>
    %23 = tpu.reciprocal %22 : vector<8x1xf32> -> vector<8x1xf32>
    %24 = vector.broadcast %23 : vector<8x1xf32> to vector<8x128xf32>
    %25 = arith.mulf %20, %24 : vector<8x128xf32>
    %c0_13 = arith.constant 0 : index
    %c0_14 = arith.constant 0 : index
    %26 = vector.load %arg7[%c0_13, %c0_14] : memref<8x128xf32, #tpu.memory_space<vmem>>, vector<8x128xf32>
    tpu.vector_store %arg7[%c0_13, %c0_14], %25 {strides = array<i32>} : memref<8x128xf32, #tpu.memory_space<vmem>>, vector<8x128xf32>,
    %c0_15 = arith.constant 0 : index
    %c0_16 = arith.constant 0 : index
    %27 = vector.load %arg2[%c0_15, %c0_16] : memref<8x1xf32, #tpu.memory_space<vmem>>, vector<8x1xf32>
    %28 = math.exp %27 : vector<8x1xf32>
    %cst_17 = arith.constant dense<0xFF800000> : vector<8xf32>
    %29 = vector.multi_reduction <maximumf>, %14, %cst_17 [1] : vector<8x128xf32> to vector<8xf32>
    %30 = vector.shape_cast %29 : vector<8xf32> to vector<8x1xf32>
    %31 = vector.broadcast %30 : vector<8x1xf32> to vector<8x128xf32>
    %32 = arith.subf %14, %31 : vector<8x128xf32>
    %33 = math.exp %32 : vector<8x128xf32>
    %cst_18 = arith.constant dense<0.000000e+00> : vector<8xf32>
    %34 = vector.multi_reduction <add>, %33, %cst_18 [1] : vector<8x128xf32> to vector<8xf32>
    %35 = vector.shape_cast %34 : vector<8xf32> to vector<8x1xf32>
    %36 = tpu.reciprocal %35 : vector<8x1xf32> -> vector<8x1xf32>
    %37 = vector.broadcast %36 : vector<8x1xf32> to vector<8x128xf32>
    %38 = arith.mulf %33, %37 : vector<8x128xf32>
    %39 = vector.broadcast %28 : vector<8x1xf32> to vector<8x128xf32>
    %40 = arith.mulf %39, %38 : vector<8x128xf32>
    %c0_19 = arith.constant 0 : index
    %c0_20 = arith.constant 0 : index
    %41 = vector.load %arg8[%c0_19, %c0_20] : memref<8x128xf32, #tpu.memory_space<vmem>>, vector<8x128xf32>
    tpu.vector_store %arg8[%c0_19, %c0_20], %40 {strides = array<i32>} : memref<8x128xf32, #tpu.memory_space<vmem>>, vector<8x128xf32>,
    %c0_21 = arith.constant 0 : index
    %c0_22 = arith.constant 0 : index
    %42 = vector.load %arg9[%c0_21, %c0_22] : memref<8x128xf32, #tpu.memory_space<vmem>>, vector<8x128xf32>
    tpu.vector_store %arg9[%c0_21, %c0_22], %15 {strides = array<i32>} : memref<8x128xf32, #tpu.memory_space<vmem>>, vector<8x128xf32>,
    return
  }
  func.func @transform_0(%arg0: i32) -> (i32, i32) {
    %c0_i32 = arith.constant 0 : i32
    %c0_i32_0 = arith.constant 0 : i32
    return %arg0, %c0_i32 : i32, i32
  }
  func.func @transform_1(%arg0: i32) -> (i32, i32) {
    %c0_i32 = arith.constant 0 : i32
    %c0_i32_0 = arith.constant 0 : i32
    return %arg0, %c0_i32 : i32, i32
  }
  func.func @transform_2(%arg0: i32) -> (i32, i32) {
    %c0_i32 = arith.constant 0 : i32
    %c0_i32_0 = arith.constant 0 : i32
    %c0_i32_1 = arith.constant 0 : i32
    return %c0_i32, %c0_i32_0 : i32, i32
  }
  func.func @transform_3(%arg0: i32) -> (i32, i32) {
    %c0_i32 = arith.constant 0 : i32
    %c0_i32_0 = arith.constant 0 : i32
    %c0_i32_1 = arith.constant 0 : i32
    return %c0_i32, %c0_i32_0 : i32, i32
  }
  func.func @transform_4(%arg0: i32) -> (i32, i32) {
    %c0_i32 = arith.constant 0 : i32
    %c0_i32_0 = arith.constant 0 : i32
    %c0_i32_1 = arith.constant 0 : i32
    return %c0_i32, %c0_i32_0 : i32, i32
  }
  func.func @transform_5(%arg0: i32) -> (i32, i32) {
    %c0_i32 = arith.constant 0 : i32
    %c0_i32_0 = arith.constant 0 : i32
    %c0_i32_1 = arith.constant 0 : i32
    return %c0_i32, %c0_i32_0 : i32, i32
  }
  func.func @transform_6(%arg0: i32) -> (i32, i32) {
    %c0_i32 = arith.constant 0 : i32
    %c0_i32_0 = arith.constant 0 : i32
    return %arg0, %c0_i32 : i32, i32
  }
  func.func @transform_7(%arg0: i32) -> (i32, i32) {
    %c0_i32 = arith.constant 0 : i32
    %c0_i32_0 = arith.constant 0 : i32
    return %arg0, %c0_i32 : i32, i32
  }
  func.func @transform_8(%arg0: i32) -> (i32, i32) {
    %c0_i32 = arith.constant 0 : i32
    %c0_i32_0 = arith.constant 0 : i32
    return %arg0, %c0_i32 : i32, i32
  }
}

module attributes {stable_mosaic.version = 11 : i64} {
  func.func @_decoder_kernel(%arg0: i32, %arg1: memref<8x128xf32, #tpu.memory_space<vmem>>, %arg2: memref<8x1xf32, #tpu.memory_space<vmem>>, %arg3: memref<128x128xf32, #tpu.memory_space<vmem>>, %arg4: memref<1x128xf32, #tpu.memory_space<vmem>>, %arg5: memref<128x384xf32, #tpu.memory_space<vmem>>, %arg6: memref<1x384xf32, #tpu.memory_space<vmem>>, %arg7: memref<8x128xf32, #tpu.memory_space<vmem>>, %arg8: memref<8x128xf32, #tpu.memory_space<vmem>>, %arg9: memref<8x128xf32, #tpu.memory_space<vmem>>) attributes {dimension_semantics = [#tpu.dimension_semantics<parallel>], iteration_bounds = array<i64: 2>, scalar_prefetch = 0 : i64, scratch_operands = 0 : i64, tpu.core_type = #tpu.core_type<tc>, window_params = [{transform_indices = @transform_0, window_bounds = array<i64: 8, 128>}, {transform_indices = @transform_1, window_bounds = array<i64: 8, 1>}, {pipeline_mode = #tpu.pipeline_mode<synchronous>, transform_indices = @transform_2, window_bounds = array<i64: 128, 128>}, {pipeline_mode = #tpu.pipeline_mode<synchronous>, transform_indices = @transform_3, window_bounds = array<i64: 1, 128>}, {pipeline_mode = #tpu.pipeline_mode<synchronous>, transform_indices = @transform_4, window_bounds = array<i64: 128, 384>}, {pipeline_mode = #tpu.pipeline_mode<synchronous>, transform_indices = @transform_5, window_bounds = array<i64: 1, 384>}, {transform_indices = @transform_6, window_bounds = array<i64: 8, 128>}, {transform_indices = @transform_7, window_bounds = array<i64: 8, 128>}, {transform_indices = @transform_8, window_bounds = array<i64: 8, 128>}]} {
    %c0 = arith.constant 0 : index
    %c0_0 = arith.constant 0 : index
    %0 = vector.load %arg1[%c0, %c0_0] : memref<8x128xf32, #tpu.memory_space<vmem>>, vector<8x128xf32>
    %c0_1 = arith.constant 0 : index
    %c0_2 = arith.constant 0 : index
    %1 = vector.load %arg3[%c0_1, %c0_2] : memref<128x128xf32, #tpu.memory_space<vmem>>, vector<128x128xf32>
    %cst = arith.constant dense<0.000000e+00> : vector<8x128xf32>
    %2 = tpu.matmul %0, %1, %cst {dimension_numbers = #tpu.dot_dimension_numbers<[1], [0], [0], [1], [0, 0, 1, 1], [], []>} : vector<8x128xf32>, vector<128x128xf32>, vector<8x128xf32> -> vector<8x128xf32>
    %c0_3 = arith.constant 0 : index
    %c0_4 = arith.constant 0 : index
    %3 = vector.load %arg4[%c0_3, %c0_4] : memref<1x128xf32, #tpu.memory_space<vmem>>, vector<1x128xf32>
    %4 = vector.broadcast %3 : vector<1x128xf32> to vector<8x128xf32>
    %5 = arith.addf %2, %4 : vector<8x128xf32>
    %cst_5 = arith.constant 0.000000e+00 : f32
    %6 = vector.broadcast %cst_5 : f32 to vector<8x128xf32>
    %7 = arith.maximumf %5, %6 : vector<8x128xf32>
    %c0_6 = arith.constant 0 : index
    %c0_7 = arith.constant 0 : index
    %8 = vector.load %arg5[%c0_6, %c0_7] : memref<128x384xf32, #tpu.memory_space<vmem>>, vector<128x384xf32>
    %cst_8 = arith.constant dense<0.000000e+00> : vector<8x384xf32>
    %9 = tpu.matmul %7, %8, %cst_8 {dimension_numbers = #tpu.dot_dimension_numbers<[1], [0], [0], [1], [0, 0, 1, 1], [], []>} : vector<8x128xf32>, vector<128x384xf32>, vector<8x384xf32> -> vector<8x384xf32>
    %c0_9 = arith.constant 0 : index
    %c0_10 = arith.constant 0 : index
    %10 = vector.load %arg6[%c0_9, %c0_10] : memref<1x384xf32, #tpu.memory_space<vmem>>, vector<1x384xf32>
    %11 = vector.broadcast %10 : vector<1x384xf32> to vector<8x384xf32>
    %12 = arith.addf %9, %11 : vector<8x384xf32>
    %13 = vector.extract_strided_slice %12 {offsets = [0, 0], sizes = [8, 128], strides = [1, 1]} : vector<8x384xf32> to vector<8x128xf32>
    %14 = vector.extract_strided_slice %12 {offsets = [0, 128], sizes = [8, 128], strides = [1, 1]} : vector<8x384xf32> to vector<8x128xf32>
    %15 = vector.extract_strided_slice %12 {offsets = [0, 256], sizes = [8, 128], strides = [1, 1]} : vector<8x384xf32> to vector<8x128xf32>
    %cst_11 = arith.constant dense<0xFF800000> : vector<8xf32>
    %16 = vector.multi_reduction <maximumf>, %13, %cst_11 [1] : vector<8x128xf32> to vector<8xf32>
    %17 = vector.shape_cast %16 : vector<8xf32> to vector<8x1xf32>
    %18 = vector.broadcast %17 : vector<8x1xf32> to vector<8x128xf32>
    %19 = arith.subf %13, %18 : vector<8x128xf32>
    %20 = math.exp %19 : vector<8x128xf32>
    %cst_12 = arith.constant dense<0.000000e+00> : vector<8xf32>
    %21 = vector.multi_reduction <add>, %20, %cst_12 [1] : vector<8x128xf32> to vector<8xf32>
    %22 = vector.shape_cast %21 : vector<8xf32> to vector<8x1xf32>
    %23 = tpu.reciprocal %22 : vector<8x1xf32> -> vector<8x1xf32>
    %24 = vector.broadcast %23 : vector<8x1xf32> to vector<8x128xf32>
    %25 = arith.mulf %20, %24 : vector<8x128xf32>
    %c0_13 = arith.constant 0 : index
    %c0_14 = arith.constant 0 : index
    %26 = vector.load %arg7[%c0_13, %c0_14] : memref<8x128xf32, #tpu.memory_space<vmem>>, vector<8x128xf32>
    tpu.vector_store %arg7[%c0_13, %c0_14], %25 {strides = array<i32>} : memref<8x128xf32, #tpu.memory_space<vmem>>, vector<8x128xf32>,
    %c0_15 = arith.constant 0 : index
    %c0_16 = arith.constant 0 : index
    %27 = vector.load %arg2[%c0_15, %c0_16] : memref<8x1xf32, #tpu.memory_space<vmem>>, vector<8x1xf32>
    %28 = math.exp %27 : vector<8x1xf32>
    %cst_17 = arith.constant dense<0xFF800000> : vector<8xf32>
    %29 = vector.multi_reduction <maximumf>, %14, %cst_17 [1] : vector<8x128xf32> to vector<8xf32>
    %30 = vector.shape_cast %29 : vector<8xf32> to vector<8x1xf32>
    %31 = vector.broadcast %30 : vector<8x1xf32> to vector<8x128xf32>
    %32 = arith.subf %14, %31 : vector<8x128xf32>
    %33 = math.exp %32 : vector<8x128xf32>
    %cst_18 = arith.constant dense<0.000000e+00> : vector<8xf32>
    %34 = vector.multi_reduction <add>, %33, %cst_18 [1] : vector<8x128xf32> to vector<8xf32>
    %35 = vector.shape_cast %34 : vector<8xf32> to vector<8x1xf32>
    %36 = tpu.reciprocal %35 : vector<8x1xf32> -> vector<8x1xf32>
    %37 = vector.broadcast %36 : vector<8x1xf32> to vector<8x128xf32>
    %38 = arith.mulf %33, %37 : vector<8x128xf32>
    %39 = vector.broadcast %28 : vector<8x1xf32> to vector<8x128xf32>
    %40 = arith.mulf %39, %38 : vector<8x128xf32>
    %c0_19 = arith.constant 0 : index
    %c0_20 = arith.constant 0 : index
    %41 = vector.load %arg8[%c0_19, %c0_20] : memref<8x128xf32, #tpu.memory_space<vmem>>, vector<8x128xf32>
    tpu.vector_store %arg8[%c0_19, %c0_20], %40 {strides = array<i32>} : memref<8x128xf32, #tpu.memory_space<vmem>>, vector<8x128xf32>,
    %c0_21 = arith.constant 0 : index
    %c0_22 = arith.constant 0 : index
    %42 = vector.load %arg9[%c0_21, %c0_22] : memref<8x128xf32, #tpu.memory_space<vmem>>, vector<8x128xf32>
    tpu.vector_store %arg9[%c0_21, %c0_22], %15 {strides = array<i32>} : memref<8x128xf32, #tpu.memory_space<vmem>>, vector<8x128xf32>,
    return
  }
  func.func @transform_0(%arg0: i32) -> (i32, i32) {
    %c0_i32 = arith.constant 0 : i32
    %c0_i32_0 = arith.constant 0 : i32
    return %arg0, %c0_i32 : i32, i32
  }
  func.func @transform_1(%arg0: i32) -> (i32, i32) {
    %c0_i32 = arith.constant 0 : i32
    %c0_i32_0 = arith.constant 0 : i32
    return %arg0, %c0_i32 : i32, i32
  }
  func.func @transform_2(%arg0: i32) -> (i32, i32) {
    %c0_i32 = arith.constant 0 : i32
    %c0_i32_0 = arith.constant 0 : i32
    %c0_i32_1 = arith.constant 0 : i32
    return %c0_i32, %c0_i32_0 : i32, i32
  }
  func.func @transform_3(%arg0: i32) -> (i32, i32) {
    %c0_i32 = arith.constant 0 : i32
    %c0_i32_0 = arith.constant 0 : i32
    %c0_i32_1 = arith.constant 0 : i32
    return %c0_i32, %c0_i32_0 : i32, i32
  }
  func.func @transform_4(%arg0: i32) -> (i32, i32) {
    %c0_i32 = arith.constant 0 : i32
    %c0_i32_0 = arith.constant 0 : i32
    %c0_i32_1 = arith.constant 0 : i32
    return %c0_i32, %c0_i32_0 : i32, i32
  }
  func.func @transform_5(%arg0: i32) -> (i32, i32) {
    %c0_i32 = arith.constant 0 : i32
    %c0_i32_0 = arith.constant 0 : i32
    %c0_i32_1 = arith.constant 0 : i32
    return %c0_i32, %c0_i32_0 : i32, i32
  }
  func.func @transform_6(%arg0: i32) -> (i32, i32) {
    %c0_i32 = arith.constant 0 : i32
    %c0_i32_0 = arith.constant 0 : i32
    return %arg0, %c0_i32 : i32, i32
  }
  func.func @transform_7(%arg0: i32) -> (i32, i32) {
    %c0_i32 = arith.constant 0 : i32
    %c0_i32_0 = arith.constant 0 : i32
    return %arg0, %c0_i32 : i32, i32
  }
  func.func @transform_8(%arg0: i32) -> (i32, i32) {
    %c0_i32 = arith.constant 0 : i32
    %c0_i32_0 = arith.constant 0 : i32
    return %arg0, %c0_i32 : i32, i32
  }
}

</mosaic_0001>

<llo_original>
// kernel: tpu_custom_call.1
$region0: #{tpu_custom_call.1}
  #allocation0 [shape = 'u32[]', space=smem, size = 0x4, offset = 0x4, fixed_abs, tag = 'smem constant byte address 0x4 - core index']
  #allocation1 [shape = 'u32[144,128]{1,0:T(1,128)}', space=vmem, size = 0x12000, scoped, tag = 'internal scratch']
  %s0 = inlined_call_operand.vmem [shape: f32[16,128], index: 0, kind: input, shape index: {}]
  %s1 = inlined_call_operand.vmem [shape: f32[16,1], index: 1, kind: input, shape index: {}]
  %s2 = inlined_call_operand.hbm [shape: f32[128,128], index: 2, kind: input, shape index: {}]
  %s3 = inlined_call_operand.vmem [shape: f32[1,128], index: 3, kind: input, shape index: {}]
  %s4 = inlined_call_operand.hbm [shape: f32[128,384], index: 4, kind: input, shape index: {}]
  %s5 = inlined_call_operand.vmem [shape: f32[1,384], index: 5, kind: input, shape index: {}]
  %s6 = inlined_call_operand.hbm [shape: f32[16,128], index: 6, kind: output, shape index: {0}]
  %s7 = inlined_call_operand.hbm [shape: f32[16,128], index: 7, kind: output, shape index: {1}]
  %s8 = inlined_call_operand.hbm [shape: f32[16,128], index: 8, kind: output, shape index: {2}]
  %9 = xla_tuple %s6, %s7, %s8
  %s10 = sld [smem:[#allocation0]]
  $region81: #{tpu_custom_call.1} parent=0
    _
  %s12 = ssub.s32 1, %s10
  %s13 = scalar_select 0, %s12, %s10
  $region1: #{tpu_custom_call.1} parent=0
    #allocation2 [shape = 'u8[65536]{0}', space=vmem, size = 0x10000, scoped, tag = 'input window, operand 2, single buffered']
    #allocation3 [shape = 's32[2]{0}', space=sflag, size = 0x8, scoped, tag = 'scoped memory for tpu_custom_call.1']
    #allocation4 [shape = 's32[2]{0}', space=sflag, size = 0x8, scoped, tag = 'scoped memory for tpu_custom_call.1']
    #allocation5 [shape = 'u8[196608]{0}', space=vmem, size = 0x30000, scoped, tag = 'input window, operand 4, single buffered']
    #allocation6 [shape = 's32[1]{0}', space=sflag, size = 0x4, scoped, tag = 'scoped memory for tpu_custom_call.1']
    #allocation7 [shape = 'u8[8192]{0}', space=vmem, size = 0x2000, scoped, tag = 'output window, operand 0']
    #allocation8 [shape = 'u8[8192]{0}', space=vmem, size = 0x2000, scoped, tag = 'output window, operand 1']
    #allocation9 [shape = 's32[2]{0}', space=sflag, size = 0x8, scoped, tag = 'scoped memory for tpu_custom_call.1']
    #allocation10 [shape = 'u8[8192]{0}', space=vmem, size = 0x2000, scoped, tag = 'output window, operand 2']
    %14 = vsyncpa [#allocation3], 0
    %15 = vsyncpa [#allocation6], 0
    %16 = vsyncpa [#allocation4], 0
    %s17 = scalar_lea.sflag [#allocation4], 1
    %18 = vsyncpa %s17, 0
    %19 = vsyncpa [#allocation9], 0
    %s20 = scalar_lea.sflag [#allocation9], 1
    %21 = vsyncpa %s20, 0
    loop: start=0, step=1, limit=4
    $region2: #{tpu_custom_call.1} parent=1 // loop_pre_header
      _
    $region3: #{tpu_custom_call.1} parent=1 // loop_header
      %s23 = sphi 0, %s27
      %p24 = scmp.ge.s32.totalorder %s23, 4
      %s33 = sphi 0, %s35
      %s36 = sphi 0, %s33
      %s37 = sphi 0, %s36
      %s53 = sphi 0, %s37
      %s59 = sphi 0, %s61
      %s62 = sphi 0, %s59
      %s63 = sphi 0, %s62
      %s79 = sphi 0, %s63
      %s83 = sphi 0, %s83
      %s85 = sphi 0, %s83
      %s86 = sphi 0, %s85
      %s100 = sphi 0, %s86
      %s104 = sphi 0, %s104
      %s106 = sphi 0, %s104
      %s107 = sphi 0, %s106
      %s121 = sphi 0, %s107
      %s125 = sphi 0, %s125
      %s127 = sphi 0, %s125
      %s128 = sphi 0, %s127
      %s142 = sphi 0, %s128
      %s146 = sphi 0, %s146
      %s148 = sphi 0, %s146
      %s149 = sphi 0, %s148
      %s163 = sphi 0, %s149
      %s169 = sphi 0, %s171
      %s172 = sphi 0, %s169
      %s173 = sphi 0, %s172
      %s189 = sphi 0, %s173
      %s195 = sphi 0, %s197
      %s198 = sphi 0, %s195
      %s199 = sphi 0, %s198
      %s215 = sphi 0, %s199
      %s221 = sphi 0, %s223
      %s224 = sphi 0, %s221
      %s225 = sphi 0, %s224
      %s241 = sphi 0, %s225
    $region4: #{tpu_custom_call.1} parent=1 // loop_header_branch
      %26 = sbr.rel (%p24) target = $region8
    $region5: #{tpu_custom_call.1} parent=1 // loop_body
      %s28 = ssub.s32 %s23, 1
      %s29 = ssub.s32 %s23, 2
      %s30 = sadd.s32 %s23, 1
      %s31 = ssub.s32 %s23, %s30
      %p32 = scmp.eq.s32.totalorder %s31, 0
      %s34 = sadd.s32 %s33, 1
      %s35 = scalar_select %p32, %s33, %s34
      %p38 = pneg %p32
      %p39 = scmp.eq.s32.totalorder %s23, 1
      %p40 = por %p38, %p39
      %p41 = scmp.ne.s32.totalorder %s33, %s36
      %p42 = scmp.eq.s32.totalorder %s23, 0
      %p43 = por %p41, %p42
      %p44 = scmp.ne.s32.totalorder %s33, %s36
      %p45 = scmp.eq.s32.totalorder %s28, 1
      %p46 = por %p44, %p45
      %p47 = scmp.ne.s32.totalorder %s36, %s37
      %p48 = scmp.eq.s32.totalorder %s28, 0
      %p49 = por %p47, %p48
      %p50 = scmp.ne.s32.totalorder %s36, %s37
      %p51 = scmp.eq.s32.totalorder %s29, 1
      %p52 = por %p50, %p51
      %p54 = scmp.ne.s32.totalorder %s37, %s53
      %p55 = scmp.eq.s32.totalorder %s29, 0
      %p56 = por %p54, %p55
      %s57 = ssub.s32 %s23, %s30
      %p58 = scmp.eq.s32.totalorder %s57, 0
      %s60 = sadd.s32 %s59, 1
      %s61 = scalar_select %p58, %s59, %s60
      %p64 = pneg %p58
      %p65 = scmp.eq.s32.totalorder %s23, 1
      %p66 = por %p64, %p65
      %p67 = scmp.ne.s32.totalorder %s59, %s62
      %p68 = scmp.eq.s32.totalorder %s23, 0
      %p69 = por %p67, %p68
      %p70 = scmp.ne.s32.totalorder %s59, %s62
      %p71 = scmp.eq.s32.totalorder %s28, 1
      %p72 = por %p70, %p71
      %p73 = scmp.ne.s32.totalorder %s62, %s63
      %p74 = scmp.eq.s32.totalorder %s28, 0
      %p75 = por %p73, %p74
      %p76 = scmp.ne.s32.totalorder %s62, %s63
      %p77 = scmp.eq.s32.totalorder %s29, 1
      %p78 = por %p76, %p77
      %p80 = scmp.ne.s32.totalorder %s63, %s79
      %p81 = scmp.eq.s32.totalorder %s29, 0
      %p82 = por %p80, %p81
      %s84 = sadd.s32 %s83, 1
      %p87 = scmp.eq.s32.totalorder %s23, 1
      %p88 = scmp.ne.s32.totalorder %s83, %s85
      %p89 = scmp.eq.s32.totalorder %s23, 0
      %p90 = por %p88, %p89
      %p91 = scmp.ne.s32.totalorder %s83, %s85
      %p92 = scmp.eq.s32.totalorder %s28, 1
      %p93 = por %p91, %p92
      %p94 = scmp.ne.s32.totalorder %s85, %s86
      %p95 = scmp.eq.s32.totalorder %s28, 0
      %p96 = por %p94, %p95
      %p97 = scmp.ne.s32.totalorder %s85, %s86
      %p98 = scmp.eq.s32.totalorder %s29, 1
      %p99 = por %p97, %p98
      %p101 = scmp.ne.s32.totalorder %s86, %s100
      %p102 = scmp.eq.s32.totalorder %s29, 0
      %p103 = por %p101, %p102
      %s105 = sadd.s32 %s104, 1
      %p108 = scmp.eq.s32.totalorder %s23, 1
      %p109 = scmp.ne.s32.totalorder %s104, %s106
      %p110 = scmp.eq.s32.totalorder %s23, 0
      %p111 = por %p109, %p110
      %p112 = scmp.ne.s32.totalorder %s104, %s106
      %p113 = scmp.eq.s32.totalorder %s28, 1
      %p114 = por %p112, %p113
      %p115 = scmp.ne.s32.totalorder %s106, %s107
      %p116 = scmp.eq.s32.totalorder %s28, 0
      %p117 = por %p115, %p116
      %p118 = scmp.ne.s32.totalorder %s106, %s107
      %p119 = scmp.eq.s32.totalorder %s29, 1
      %p120 = por %p118, %p119
      %p122 = scmp.ne.s32.totalorder %s107, %s121
      %p123 = scmp.eq.s32.totalorder %s29, 0
      %p124 = por %p122, %p123
      %s126 = sadd.s32 %s125, 1
      %p129 = scmp.eq.s32.totalorder %s23, 1
      %p130 = scmp.ne.s32.totalorder %s125, %s127
      %p131 = scmp.eq.s32.totalorder %s23, 0
      %p132 = por %p130, %p131
      %p133 = scmp.ne.s32.totalorder %s125, %s127
      %p134 = scmp.eq.s32.totalorder %s28, 1
      %p135 = por %p133, %p134
      %p136 = scmp.ne.s32.totalorder %s127, %s128
      %p137 = scmp.eq.s32.totalorder %s28, 0
      %p138 = por %p136, %p137
      %p139 = scmp.ne.s32.totalorder %s127, %s128
      %p140 = scmp.eq.s32.totalorder %s29, 1
      %p141 = por %p139, %p140
      %p143 = scmp.ne.s32.totalorder %s128, %s142
      %p144 = scmp.eq.s32.totalorder %s29, 0
      %p145 = por %p143, %p144
      %s147 = sadd.s32 %s146, 1
      %p150 = scmp.eq.s32.totalorder %s23, 1
      %p151 = scmp.ne.s32.totalorder %s146, %s148
      %p152 = scmp.eq.s32.totalorder %s23, 0
      %p153 = por %p151, %p152
      %p154 = scmp.ne.s32.totalorder %s146, %s148
      %p155 = scmp.eq.s32.totalorder %s28, 1
      %p156 = por %p154, %p155
      %p157 = scmp.ne.s32.totalorder %s148, %s149
      %p158 = scmp.eq.s32.totalorder %s28, 0
      %p159 = por %p157, %p158
      %p160 = scmp.ne.s32.totalorder %s148, %s149
      %p161 = scmp.eq.s32.totalorder %s29, 1
      %p162 = por %p160, %p161
      %p164 = scmp.ne.s32.totalorder %s149, %s163
      %p165 = scmp.eq.s32.totalorder %s29, 0
      %p166 = por %p164, %p165
      %s167 = ssub.s32 %s23, %s30
      %p168 = scmp.eq.s32.totalorder %s167, 0
      %s170 = sadd.s32 %s169, 1
      %s171 = scalar_select %p168, %s169, %s170
      %p174 = pneg %p168
      %p175 = scmp.eq.s32.totalorder %s23, 1
      %p176 = por %p174, %p175
      %p177 = scmp.ne.s32.totalorder %s169, %s172
      %p178 = scmp.eq.s32.totalorder %s23, 0
      %p179 = por %p177, %p178
      %p180 = scmp.ne.s32.totalorder %s169, %s172
      %p181 = scmp.eq.s32.totalorder %s28, 1
      %p182 = por %p180, %p181
      %p183 = scmp.ne.s32.totalorder %s172, %s173
      %p184 = scmp.eq.s32.totalorder %s28, 0
      %p185 = por %p183, %p184
      %p186 = scmp.ne.s32.totalorder %s172, %s173
      %p187 = scmp.eq.s32.totalorder %s29, 1
      %p188 = por %p186, %p187
      %p190 = scmp.ne.s32.totalorder %s173, %s189
      %p191 = scmp.eq.s32.totalorder %s29, 0
      %p192 = por %p190, %p191
      %s193 = ssub.s32 %s23, %s30
      %p194 = scmp.eq.s32.totalorder %s193, 0
      %s196 = sadd.s32 %s195, 1
      %s197 = scalar_select %p194, %s195, %s196
      %p200 = pneg %p194
      %p201 = scmp.eq.s32.totalorder %s23, 1
      %p202 = por %p200, %p201
      %p203 = scmp.ne.s32.totalorder %s195, %s198
      %p204 = scmp.eq.s32.totalorder %s23, 0
      %p205 = por %p203, %p204
      %p206 = scmp.ne.s32.totalorder %s195, %s198
      %p207 = scmp.eq.s32.totalorder %s28, 1
      %p208 = por %p206, %p207
      %p209 = scmp.ne.s32.totalorder %s198, %s199
      %p210 = scmp.eq.s32.totalorder %s28, 0
      %p211 = por %p209, %p210
      %p212 = scmp.ne.s32.totalorder %s198, %s199
      %p213 = scmp.eq.s32.totalorder %s29, 1
      %p214 = por %p212, %p213
      %p216 = scmp.ne.s32.totalorder %s199, %s215
      %p217 = scmp.eq.s32.totalorder %s29, 0
      %p218 = por %p216, %p217
      %s219 = ssub.s32 %s23, %s30
      %p220 = scmp.eq.s32.totalorder %s219, 0
      %s222 = sadd.s32 %s221, 1
      %s223 = scalar_select %p220, %s221, %s222
      %p226 = pneg %p220
      %p227 = scmp.eq.s32.totalorder %s23, 1
      %p228 = por %p226, %p227
      %p229 = scmp.ne.s32.totalorder %s221, %s224
      %p230 = scmp.eq.s32.totalorder %s23, 0
      %p231 = por %p229, %p230
      %p232 = scmp.ne.s32.totalorder %s221, %s224
      %p233 = scmp.eq.s32.totalorder %s28, 1
      %p234 = por %p232, %p233
      %p235 = scmp.ne.s32.totalorder %s224, %s225
      %p236 = scmp.eq.s32.totalorder %s28, 0
      %p237 = por %p235, %p236
      %p238 = scmp.ne.s32.totalorder %s224, %s225
      %p239 = scmp.eq.s32.totalorder %s29, 1
      %p240 = por %p238, %p239
      %p242 = scmp.ne.s32.totalorder %s225, %s241
      %p243 = scmp.eq.s32.totalorder %s29, 0
      %p244 = por %p242, %p243
      %p245 = scmp.le.s32.totalorder 1, %s23
      %p246 = scmp.lt.s32.totalorder %s23, 3
      %p247 = pnand %p245, %p246
      %p248 = pneg %p247
      // Predicated region
      $region9: #{tpu_custom_call.1} parent=5 // pred_check
        _
      $region10: #{tpu_custom_call.1} parent=5 // pred_check_branch
        %250 = sbr.rel (%p247) target = $region12
      $region11: #{tpu_custom_call.1} parent=5 // pred_region
        %s251 = ssub.s32 %s23, 1
        // Predicated region
        $region13: #{tpu_custom_call.1} parent=11 // pred_check
          %p252 = pneg %p96
        $region14: #{tpu_custom_call.1} parent=11 // pred_check_branch
          %254 = sbr.rel (%p252) target = $region16
        $region15: #{tpu_custom_call.1} parent=11 // pred_region
          %s256 = ssub.s32 2048, 2048
          %257 = vsyncadd [#allocation3], %s256
          %s258 = sshll.u32 [#allocation2], 4
          %s259 = int_to_ptr.vmem [resolvable:$true] %s258
          %264 = dma.hbm_to_vmem [thread:$0]  %s2, 2048, %s259, [#allocation3], 128, 128, 8
        $region16: #{tpu_custom_call.1} parent=11 // pred_fallthru
          _
        // Predicated region
        $region17: #{tpu_custom_call.1} parent=11 // pred_check
          %p265 = pneg %p117
        $region18: #{tpu_custom_call.1} parent=11 // pred_check_branch
          %267 = sbr.rel (%p265) target = $region20
        $region19: #{tpu_custom_call.1} parent=11 // pred_region
          _
        $region20: #{tpu_custom_call.1} parent=11 // pred_fallthru
          _
        // Predicated region
        $region21: #{tpu_custom_call.1} parent=11 // pred_check
          %p268 = pneg %p138
        $region22: #{tpu_custom_call.1} parent=11 // pred_check_branch
          %270 = sbr.rel (%p268) target = $region24
        $region23: #{tpu_custom_call.1} parent=11 // pred_region
          %s272 = ssub.s32 6144, 6144
          %273 = vsyncadd [#allocation6], %s272
          %s274 = sshll.u32 [#allocation5], 4
          %s275 = int_to_ptr.vmem [resolvable:$true] %s274
          %280 = dma.hbm_to_vmem [thread:$0]  %s4, 6144, %s275, [#allocation6], 384, 384, 24
        $region24: #{tpu_custom_call.1} parent=11 // pred_fallthru
          _
        // Predicated region
        $region25: #{tpu_custom_call.1} parent=11 // pred_check
          %p281 = pneg %p159
        $region26: #{tpu_custom_call.1} parent=11 // pred_check_branch
          %283 = sbr.rel (%p281) target = $region28
        $region27: #{tpu_custom_call.1} parent=11 // pred_region
          _
        $region28: #{tpu_custom_call.1} parent=11 // pred_fallthru
          _
      $region12: #{tpu_custom_call.1} parent=5 // pred_fallthru
        _
      %p284 = scmp.lt.s32.totalorder %s23, 2
      // Predicated region
      $region29: #{tpu_custom_call.1} parent=5 // pred_check
        %p285 = pneg %p284
      $region30: #{tpu_custom_call.1} parent=5 // pred_check_branch
        %287 = sbr.rel (%p285) target = $region32
      $region31: #{tpu_custom_call.1} parent=5 // pred_region
        // Predicated region
        $region33: #{tpu_custom_call.1} parent=31 // pred_check
          %p288 = pneg %p43
        $region34: #{tpu_custom_call.1} parent=31 // pred_check_branch
          %290 = sbr.rel (%p288) target = $region36
        $region35: #{tpu_custom_call.1} parent=31 // pred_region
          %p291 = scmp.lt.s32.totalorder %s23, 1
          %s292 = scalar_select %p291, %s23, 1
          %s293 = smul.addr %s292, 8
          %s294 = scalar_lea.vmem %s0, %s293
        $region36: #{tpu_custom_call.1} parent=31 // pred_fallthru
          _
        // Predicated region
        $region37: #{tpu_custom_call.1} parent=31 // pred_check
          %p295 = pneg %p69
        $region38: #{tpu_custom_call.1} parent=31 // pred_check_branch
          %297 = sbr.rel (%p295) target = $region40
        $region39: #{tpu_custom_call.1} parent=31 // pred_region
          %p298 = scmp.lt.s32.totalorder %s23, 1
          %s299 = scalar_select %p298, %s23, 1
          %s300 = smul.addr %s299, 8
          %s301 = scalar_lea.vmem %s1, %s300
        $region40: #{tpu_custom_call.1} parent=31 // pred_fallthru
          _
      $region32: #{tpu_custom_call.1} parent=5 // pred_fallthru
        _
      %p302 = scmp.le.s32.totalorder 1, %s23
      %p303 = scmp.lt.s32.totalorder %s23, 3
      %p304 = pnand %p302, %p303
      %p305 = pneg %p304
      // Predicated region
      $region41: #{tpu_custom_call.1} parent=5 // pred_check
        _
      $region42: #{tpu_custom_call.1} parent=5 // pred_check_branch
        %307 = sbr.rel (%p304) target = $region44
      $region43: #{tpu_custom_call.1} parent=5 // pred_region
        %s308 = ssub.s32 %s23, 1
        // Predicated region
        $region45: #{tpu_custom_call.1} parent=43 // pred_check
          %p309 = pneg %p96
        $region46: #{tpu_custom_call.1} parent=43 // pred_check_branch
          %311 = sbr.rel (%p309) target = $region48
        $region47: #{tpu_custom_call.1} parent=43 // pred_region
          %312 = dma.done [#allocation3], 2048
        $region48: #{tpu_custom_call.1} parent=43 // pred_fallthru
          _
        // Predicated region
        $region49: #{tpu_custom_call.1} parent=43 // pred_check
          %p313 = pneg %p138
        $region50: #{tpu_custom_call.1} parent=43 // pred_check_branch
          %315 = sbr.rel (%p313) target = $region52
        $region51: #{tpu_custom_call.1} parent=43 // pred_region
          %316 = dma.done [#allocation6], 6144
        $region52: #{tpu_custom_call.1} parent=43 // pred_fallthru
          _
        %p317 = scmp.lt.s32.totalorder %s28, 1
        %s318 = scalar_select %p317, %s28, 1
        %s319 = smul.addr %s318, 8
        %s320 = scalar_lea.vmem %s0, %s319
        %p321 = pneg %p49
        %p322 = pneg %p46
        %p323 = scmp.lt.s32.totalorder %s28, 1
        %s324 = scalar_select %p323, %s28, 1
        %s325 = smul.addr %s324, 8
        %s326 = scalar_lea.vmem %s1, %s325
        %p327 = pneg %p75
        %p328 = pneg %p72
        %p329 = pneg %p96
        %p330 = pneg %p93
        %p331 = pneg %p117
        %p332 = pneg %p114
        %p333 = pneg %p138
        %p334 = pneg %p135
        %p335 = pneg %p159
        %p336 = pneg %p156
        %p337 = pneg %p185
        %p338 = pneg %p182
        %s339 = sand.u32 %s172, 1
        %s340 = scalar_lea.sflag [#allocation4], %s339
        %s341 = sand.u32 %s172, 1
        %s342 = smul.addr %s341, 8
        %s343 = scalar_lea.vmem [#allocation7], %s342
        %p344 = pneg %p211
        %p345 = pneg %p208
        %s346 = sand.u32 %s28, 1
        %s347 = scalar_lea.sflag [#allocation9], %s346
        %s348 = sand.u32 %s198, 1
        %s349 = smul.addr %s348, 8
        %s350 = scalar_lea.vmem [#allocation8], %s349
        %p351 = pneg %p237
        %p352 = pneg %p234
        %s353 = sand.u32 %s28, 1
        %s354 = scalar_lea.sflag [#allocation9], %s353
        %s355 = sand.u32 %s224, 1
        %s356 = smul.addr %s355, 8
        %s357 = scalar_lea.vmem [#allocation10], %s356
        %p358 = scmp.lt.s32.totalorder %s28, 1
        %s359 = scalar_select %p358, %s28, 1
        %s360 = smul.addr %s359, 8
        %s361 = scalar_lea.vmem %s0, %s360
        %p362 = scmp.lt.s32.totalorder %s28, 1
        %s363 = scalar_select %p362, %s28, 1
        %s364 = smul.addr %s363, 8
        %s365 = scalar_lea.vmem %s1, %s364
        %v366 = vld [vmem:[%s361] sm:$0xff]
        %v367 = vld [vmem:[#allocation2] sm:$0xff]
        %v368 = vld [vmem:[#allocation2 + $0x8] sm:$0xff]
        %v369 = vld [vmem:[#allocation2 + $0x10] sm:$0xff]
        %v370 = vld [vmem:[#allocation2 + $0x18] sm:$0xff]
        %v371 = vld [vmem:[#allocation2 + $0x20] sm:$0xff]
        %v372 = vld [vmem:[#allocation2 + $0x28] sm:$0xff]
        %v373 = vld [vmem:[#allocation2 + $0x30] sm:$0xff]
        %v374 = vld [vmem:[#allocation2 + $0x38] sm:$0xff]
        %v375 = vld [vmem:[#allocation2 + $0x40] sm:$0xff]
        %v376 = vld [vmem:[#allocation2 + $0x48] sm:$0xff]
        %v377 = vld [vmem:[#allocation2 + $0x50] sm:$0xff]
        %v378 = vld [vmem:[#allocation2 + $0x58] sm:$0xff]
        %v379 = vld [vmem:[#allocation2 + $0x60] sm:$0xff]
        %v380 = vld [vmem:[#allocation2 + $0x68] sm:$0xff]
        %v381 = vld [vmem:[#allocation2 + $0x70] sm:$0xff]
        %v382 = vld [vmem:[#allocation2 + $0x78] sm:$0xff]
        %v383 = vld [vmem:[%s3] sm:$0x1]
        %v385 = vlaneseq
        %v386 = vshrl.u32 %v385, 7
        %v387 = vsub.s32 0, %v386
        %v388 = vrot.slane %v383, %v387
        %390 = vmatprep.subr.mxu0 0.0
        %391 = vmatpush1.msra.mxu0 %v382
        %392 = vmatprep.subr.mxu0 0.0
        %393 = vmatpush1.msra.mxu0 %v381
        %394 = vmatprep.subr.mxu0 0.0
        %395 = vmatpush1.msra.mxu0 %v380
        %396 = vmatprep.subr.mxu0 0.0
        %397 = vmatpush1.msra.mxu0 %v379
        %398 = vmatprep.subr.mxu0 0.0
        %399 = vmatpush1.msra.mxu0 %v378
        %400 = vmatprep.subr.mxu0 0.0
        %401 = vmatpush1.msra.mxu0 %v377
        %402 = vmatprep.subr.mxu0 0.0
        %403 = vmatpush1.msra.mxu0 %v376
        %404 = vmatprep.subr.mxu0 0.0
        %405 = vmatpush1.msra.mxu0 %v375
        %406 = vmatprep.subr.mxu0 0.0
        %407 = vmatpush1.msra.mxu0 %v374
        %408 = vmatprep.subr.mxu0 0.0
        %409 = vmatpush1.msra.mxu0 %v373
        %410 = vmatprep.subr.mxu0 0.0
        %411 = vmatpush1.msra.mxu0 %v372
        %412 = vmatprep.subr.mxu0 0.0
        %413 = vmatpush1.msra.mxu0 %v371
        %414 = vmatprep.subr.mxu0 0.0
        %415 = vmatpush1.msra.mxu0 %v370
        %416 = vmatprep.subr.mxu0 0.0
        %417 = vmatpush1.msra.mxu0 %v369
        %418 = vmatprep.subr.mxu0 0.0
        %419 = vmatpush1.msra.mxu0 %v368
        %420 = vmatprep.subr.mxu0 0.0
        %421 = vmatpush1.msra.mxu0 %v367
        %422 = vmatprep.subr.mxu0 0.0
        %423 = vmatpush2.msra.mxu0 0.0
        %424 = vmatprep.subr.mxu0 0.0
        %425 = vmatpush2.msra.mxu0 0.0
        %426 = vmatprep.subr.mxu0 0.0
        %427 = vmatpush2.msra.mxu0 0.0
        %428 = vmatprep.subr.mxu0 0.0
        %429 = vmatpush2.msra.mxu0 0.0
        %430 = vmatprep.subr.mxu0 0.0
        %431 = vmatpush2.msra.mxu0 0.0
        %432 = vmatprep.subr.mxu0 0.0
        %433 = vmatpush2.msra.mxu0 0.0
        %434 = vmatprep.subr.mxu0 0.0
        %435 = vmatpush2.msra.mxu0 0.0
        %436 = vmatprep.subr.mxu0 0.0
        %437 = vmatpush2.msra.mxu0 0.0
        %438 = vmatprep.subr.mxu0 0.0
        %439 = vmatpush2.msra.mxu0 0.0
        %440 = vmatprep.subr.mxu0 0.0
        %441 = vmatpush2.msra.mxu0 0.0
        %442 = vmatprep.subr.mxu0 0.0
        %443 = vmatpush2.msra.mxu0 0.0
        %444 = vmatprep.subr.mxu0 0.0
        %445 = vmatpush2.msra.mxu0 0.0
        %446 = vmatprep.subr.mxu0 0.0
        %447 = vmatpush2.msra.mxu0 0.0
        %448 = vmatprep.subr.mxu0 0.0
        %449 = vmatpush2.msra.mxu0 0.0
        %450 = vmatprep.subr.mxu0 0.0
        %451 = vmatpush2.msra.mxu0 0.0
        %452 = vmatprep.subr.mxu0 0.0
        %453 = vmatpush2.msra.mxu0 0.0
        %454 = vmatprep.mubr.f32.mxu0 0.0
        %455 = vmatmul.mubr.f32.gmra.mxu0 %v366
        %v456 = vpop.f32.mrf.mxu0
        %v457 = vadd.f32 %v388, %v456
        %v458 = vpop.f32.mrf.mxu0
        %459 = vdwg.mxu0
        %v460 = vmax.f32 %v457, 0.0
        %v461 = vld [vmem:[#allocation5] sm:$0xff]
        %v462 = vld [vmem:[#allocation5 + $0x8] sm:$0xff]
        %v463 = vld [vmem:[#allocation5 + $0x10] sm:$0xff]
        %v464 = vld [vmem:[#allocation5 + $0x18] sm:$0xff]
        %v465 = vld [vmem:[#allocation5 + $0x20] sm:$0xff]
        %v466 = vld [vmem:[#allocation5 + $0x28] sm:$0xff]
        %v467 = vld [vmem:[#allocation5 + $0x30] sm:$0xff]
        %v468 = vld [vmem:[#allocation5 + $0x38] sm:$0xff]
        %v469 = vld [vmem:[#allocation5 + $0x40] sm:$0xff]
        %v470 = vld [vmem:[#allocation5 + $0x48] sm:$0xff]
        %v471 = vld [vmem:[#allocation5 + $0x50] sm:$0xff]
        %v472 = vld [vmem:[#allocation5 + $0x58] sm:$0xff]
        %v473 = vld [vmem:[#allocation5 + $0x60] sm:$0xff]
        %v474 = vld [vmem:[#allocation5 + $0x68] sm:$0xff]
        %v475 = vld [vmem:[#allocation5 + $0x70] sm:$0xff]
        %v476 = vld [vmem:[#allocation5 + $0x78] sm:$0xff]
        %v477 = vld [vmem:[#allocation5 + $0x80] sm:$0xff]
        %v478 = vld [vmem:[#allocation5 + $0x88] sm:$0xff]
        %v479 = vld [vmem:[#allocation5 + $0x90] sm:$0xff]
        %v480 = vld [vmem:[#allocation5 + $0x98] sm:$0xff]
        %v481 = vld [vmem:[#allocation5 + $0xa0] sm:$0xff]
        %v482 = vld [vmem:[#allocation5 + $0xa8] sm:$0xff]
        %v483 = vld [vmem:[#allocation5 + $0xb0] sm:$0xff]
        %v484 = vld [vmem:[#allocation5 + $0xb8] sm:$0xff]
        %v485 = vld [vmem:[#allocation5 + $0xc0] sm:$0xff]
        %v486 = vld [vmem:[#allocation5 + $0xc8] sm:$0xff]
        %v487 = vld [vmem:[#allocation5 + $0xd0] sm:$0xff]
        %v488 = vld [vmem:[#allocation5 + $0xd8] sm:$0xff]
        %v489 = vld [vmem:[#allocation5 + $0xe0] sm:$0xff]
        %v490 = vld [vmem:[#allocation5 + $0xe8] sm:$0xff]
        %v491 = vld [vmem:[#allocation5 + $0xf0] sm:$0xff]
        %v492 = vld [vmem:[#allocation5 + $0xf8] sm:$0xff]
        %v493 = vld [vmem:[#allocation5 + $0x100] sm:$0xff]
        %v494 = vld [vmem:[#allocation5 + $0x108] sm:$0xff]
        %v495 = vld [vmem:[#allocation5 + $0x110] sm:$0xff]
        %v496 = vld [vmem:[#allocation5 + $0x118] sm:$0xff]
        %v497 = vld [vmem:[#allocation5 + $0x120] sm:$0xff]
        %v498 = vld [vmem:[#allocation5 + $0x128] sm:$0xff]
        %v499 = vld [vmem:[#allocation5 + $0x130] sm:$0xff]
        %v500 = vld [vmem:[#allocation5 + $0x138] sm:$0xff]
        %v501 = vld [vmem:[#allocation5 + $0x140] sm:$0xff]
        %v502 = vld [vmem:[#allocation5 + $0x148] sm:$0xff]
        %v503 = vld [vmem:[#allocation5 + $0x150] sm:$0xff]
        %v504 = vld [vmem:[#allocation5 + $0x158] sm:$0xff]
        %v505 = vld [vmem:[#allocation5 + $0x160] sm:$0xff]
        %v506 = vld [vmem:[#allocation5 + $0x168] sm:$0xff]
        %v507 = vld [vmem:[#allocation5 + $0x170] sm:$0xff]
        %v508 = vld [vmem:[#allocation5 + $0x178] sm:$0xff]
        %v509 = vld [vmem:[%s5] sm:$0x7]
        %v511 = vlaneseq
        %v512 = vshrl.u32 %v511, 7
        %v513 = vsub.s32 0, %v512
        %v514 = vrot.slane %v509, %v513
        %v515 = vlaneseq
        %v516 = vshrl.u32 %v515, 7
        %v517 = vsub.s32 1, %v516
        %v518 = vrot.slane %v509, %v517
        %v519 = vlaneseq
        %v520 = vshrl.u32 %v519, 7
        %v521 = vsub.s32 2, %v520
        %v522 = vrot.slane %v509, %v521
        %526 = vmatprep.subr.mxu0 %v507
        %527 = vmatpush1.msra.mxu0 %v506
        %528 = vmatprep.subr.mxu0 %v504
        %529 = vmatpush1.msra.mxu0 %v503
        %530 = vmatprep.subr.mxu0 %v501
        %531 = vmatpush1.msra.mxu0 %v500
        %532 = vmatprep.subr.mxu0 %v498
        %533 = vmatpush1.msra.mxu0 %v497
        %534 = vmatprep.subr.mxu0 %v495
        %535 = vmatpush1.msra.mxu0 %v494
        %536 = vmatprep.subr.mxu0 %v492
        %537 = vmatpush1.msra.mxu0 %v491
        %538 = vmatprep.subr.mxu0 %v489
        %539 = vmatpush1.msra.mxu0 %v488
        %540 = vmatprep.subr.mxu0 %v486
        %541 = vmatpush1.msra.mxu0 %v485
        %542 = vmatprep.subr.mxu0 %v483
        %543 = vmatpush1.msra.mxu0 %v482
        %544 = vmatprep.subr.mxu0 %v480
        %545 = vmatpush1.msra.mxu0 %v479
        %546 = vmatprep.subr.mxu0 %v477
        %547 = vmatpush1.msra.mxu0 %v476
        %548 = vmatprep.subr.mxu0 %v474
        %549 = vmatpush1.msra.mxu0 %v473
        %550 = vmatprep.subr.mxu0 %v471
        %551 = vmatpush1.msra.mxu0 %v470
        %552 = vmatprep.subr.mxu0 %v468
        %553 = vmatpush1.msra.mxu0 %v467
        %554 = vmatprep.subr.mxu0 %v465
        %555 = vmatpush1.msra.mxu0 %v464
        %556 = vmatprep.subr.mxu0 %v462
        %557 = vmatpush1.msra.mxu0 %v461
        %558 = vmatprep.subr.mxu0 0.0
        %559 = vmatpush2.msra.mxu0 0.0
        %560 = vmatprep.subr.mxu0 0.0
        %561 = vmatpush2.msra.mxu0 0.0
        %562 = vmatprep.subr.mxu0 0.0
        %563 = vmatpush2.msra.mxu0 0.0
        %564 = vmatprep.subr.mxu0 0.0
        %565 = vmatpush2.msra.mxu0 0.0
        %566 = vmatprep.subr.mxu0 0.0
        %567 = vmatpush2.msra.mxu0 0.0
        %568 = vmatprep.subr.mxu0 0.0
        %569 = vmatpush2.msra.mxu0 0.0
        %570 = vmatprep.subr.mxu0 0.0
        %571 = vmatpush2.msra.mxu0 0.0
        %572 = vmatprep.subr.mxu0 0.0
        %573 = vmatpush2.msra.mxu0 0.0
        %574 = vmatprep.subr.mxu0 0.0
        %575 = vmatpush2.msra.mxu0 0.0
        %576 = vmatprep.subr.mxu0 0.0
        %577 = vmatpush2.msra.mxu0 0.0
        %578 = vmatprep.subr.mxu0 0.0
        %579 = vmatpush2.msra.mxu0 0.0
        %580 = vmatprep.subr.mxu0 0.0
        %581 = vmatpush2.msra.mxu0 0.0
        %582 = vmatprep.subr.mxu0 0.0
        %583 = vmatpush2.msra.mxu0 0.0
        %584 = vmatprep.subr.mxu0 0.0
        %585 = vmatpush2.msra.mxu0 0.0
        %586 = vmatprep.subr.mxu0 0.0
        %587 = vmatpush2.msra.mxu0 0.0
        %588 = vmatprep.subr.mxu0 0.0
        %589 = vmatpush2.msra.mxu0 0.0
        %590 = vmatprep.mubr.f32.mxu0 0.0
        %591 = vmatmul.mubr.f32.gmra.mxu0 %v460
        %v592 = vpop.f32.mrf.mxu0
        %v593 = vadd.f32 %v514, %v592
        %v594 = vpop.f32.mrf.mxu0
        %v595 = vadd.f32 %v518, %v594
        %596 = vdwg.mxu0
        %597 = vmatprep.subr.mxu0 0.0
        %598 = vmatpush1.msra.mxu0 %v508
        %599 = vmatprep.subr.mxu0 0.0
        %600 = vmatpush1.msra.mxu0 %v505
        %601 = vmatprep.subr.mxu0 0.0
        %602 = vmatpush1.msra.mxu0 %v502
        %603 = vmatprep.subr.mxu0 0.0
        %604 = vmatpush1.msra.mxu0 %v499
        %605 = vmatprep.subr.mxu0 0.0
        %606 = vmatpush1.msra.mxu0 %v496
        %607 = vmatprep.subr.mxu0 0.0
        %608 = vmatpush1.msra.mxu0 %v493
        %609 = vmatprep.subr.mxu0 0.0
        %610 = vmatpush1.msra.mxu0 %v490
        %611 = vmatprep.subr.mxu0 0.0
        %612 = vmatpush1.msra.mxu0 %v487
        %613 = vmatprep.subr.mxu0 0.0
        %614 = vmatpush1.msra.mxu0 %v484
        %615 = vmatprep.subr.mxu0 0.0
        %616 = vmatpush1.msra.mxu0 %v481
        %617 = vmatprep.subr.mxu0 0.0
        %618 = vmatpush1.msra.mxu0 %v478
        %619 = vmatprep.subr.mxu0 0.0
        %620 = vmatpush1.msra.mxu0 %v475
        %621 = vmatprep.subr.mxu0 0.0
        %622 = vmatpush1.msra.mxu0 %v472
        %623 = vmatprep.subr.mxu0 0.0
        %624 = vmatpush1.msra.mxu0 %v469
        %625 = vmatprep.subr.mxu0 0.0
        %626 = vmatpush1.msra.mxu0 %v466
        %627 = vmatprep.subr.mxu0 0.0
        %628 = vmatpush1.msra.mxu0 %v463
        %629 = vmatprep.subr.mxu0 0.0
        %630 = vmatpush2.msra.mxu0 0.0
        %631 = vmatprep.subr.mxu0 0.0
        %632 = vmatpush2.msra.mxu0 0.0
        %633 = vmatprep.subr.mxu0 0.0
        %634 = vmatpush2.msra.mxu0 0.0
        %635 = vmatprep.subr.mxu0 0.0
        %636 = vmatpush2.msra.mxu0 0.0
        %637 = vmatprep.subr.mxu0 0.0
        %638 = vmatpush2.msra.mxu0 0.0
        %639 = vmatprep.subr.mxu0 0.0
        %640 = vmatpush2.msra.mxu0 0.0
        %641 = vmatprep.subr.mxu0 0.0
        %642 = vmatpush2.msra.mxu0 0.0
        %643 = vmatprep.subr.mxu0 0.0
        %644 = vmatpush2.msra.mxu0 0.0
        %645 = vmatprep.subr.mxu0 0.0
        %646 = vmatpush2.msra.mxu0 0.0
        %647 = vmatprep.subr.mxu0 0.0
        %648 = vmatpush2.msra.mxu0 0.0
        %649 = vmatprep.subr.mxu0 0.0
        %650 = vmatpush2.msra.mxu0 0.0
        %651 = vmatprep.subr.mxu0 0.0
        %652 = vmatpush2.msra.mxu0 0.0
        %653 = vmatprep.subr.mxu0 0.0
        %654 = vmatpush2.msra.mxu0 0.0
        %655 = vmatprep.subr.mxu0 0.0
        %656 = vmatpush2.msra.mxu0 0.0
        %657 = vmatprep.subr.mxu0 0.0
        %658 = vmatpush2.msra.mxu0 0.0
        %659 = vmatprep.subr.mxu0 0.0
        %660 = vmatpush2.msra.mxu0 0.0
        %661 = vmatprep.mubr.f32.mxu0 0.0
        %662 = vmatmul.mubr.f32.gmra.mxu0 %v460
        %v663 = vpop.f32.mrf.mxu0
        %v664 = vadd.f32 %v522, %v663
        %v665 = vpop.f32.mrf.mxu0
        %666 = vdwg.mxu0
        %667 = vmax.xlane.f32.xlu0 %v593
        %v668 = vpop.xlane.xlu0 %667
        %v669 = vsub.f32 %v593, %v668
        %v670 = vmul.f32 %v669, 1.442695
        %v671 = vpow.pop %v670
        %672 = vadd.xlane.f32.xlu0 %v671
        %v673 = vpop.xlane.xlu0 %672
        %v674 = vrcp.pop %v673
        %v675 = vmul.f32 %v671, %v674
        %676 = vst [vmem:[%s343] sm:$0xff] %v675
        %v677 = vld [vmem:[%s365] sm:$0xff]
        %v678 = vmul.f32 %v677, 1.442695
        %v679 = vpow.pop %v678
        %680 = vmax.xlane.f32.xlu0 %v595
        %v681 = vpop.xlane.xlu0 %680
        %v682 = vsub.f32 %v595, %v681
        %v683 = vmul.f32 %v682, 1.442695
        %v684 = vpow.pop %v683
        %685 = vadd.xlane.f32.xlu0 %v684
        %v686 = vpop.xlane.xlu0 %685
        %v687 = vrcp.pop %v686
        %v688 = vmul.f32 %v684, %v687
        %690 = vset.pattern.permute.xlu0 0
        %691 = vperm.xlu0 %690, %v679
        %v692 = vpop.permute.xlu0 %691
        %v694 = vmul.f32 %v692, %v688
        %695 = vst [vmem:[%s350] sm:$0xff] %v694
        %696 = vst [vmem:[%s357] sm:$0xff] %v664
        %s697 = sand.u32 %s172, 1
        %s698 = scalar_lea.sflag [#allocation4], %s697
        %s699 = sand.u32 %s172, 1
        %s700 = smul.addr %s699, 8
        %s701 = scalar_lea.vmem [#allocation7], %s700
        %s702 = sand.u32 %s28, 1
        %s703 = scalar_lea.sflag [#allocation9], %s702
        %s704 = sand.u32 %s198, 1
        %s705 = smul.addr %s704, 8
        %s706 = scalar_lea.vmem [#allocation8], %s705
        %s707 = sand.u32 %s28, 1
        %s708 = scalar_lea.sflag [#allocation9], %s707
        %s709 = sand.u32 %s224, 1
        %s710 = smul.addr %s709, 8
        %s711 = scalar_lea.vmem [#allocation10], %s710
        // Predicated region
        $region53: #{tpu_custom_call.1} parent=43 // pred_check
          %p712 = pneg %p182
        $region54: #{tpu_custom_call.1} parent=43 // pred_check_branch
          %714 = sbr.rel (%p712) target = $region56
        $region55: #{tpu_custom_call.1} parent=43 // pred_region
          %s716 = ssub.s32 128, 128
          %717 = vsyncadd %s698, %s716
          %s718 = smul.addr %s28, 128
          %s719 = scalar_lea.hbm %s6, %s718
          %s721 = sshll.u32 %s701, 4
          %s722 = int_to_ptr.vmem [resolvable:$true] %s721
          %724 = dma.vmem_to_hbm [thread:$0]  %s722, 128, %s719, %s698
        $region56: #{tpu_custom_call.1} parent=43 // pred_fallthru
          _
        // Predicated region
        $region57: #{tpu_custom_call.1} parent=43 // pred_check
          %p725 = pneg %p208
        $region58: #{tpu_custom_call.1} parent=43 // pred_check_branch
          %727 = sbr.rel (%p725) target = $region60
        $region59: #{tpu_custom_call.1} parent=43 // pred_region
          %s729 = ssub.s32 128, 128
          %730 = vsyncadd %s703, %s729
          %s731 = smul.addr %s28, 128
          %s732 = scalar_lea.hbm %s7, %s731
          %s734 = sshll.u32 %s706, 4
          %s735 = int_to_ptr.vmem [resolvable:$true] %s734
          %737 = dma.vmem_to_hbm [thread:$0]  %s735, 128, %s732, %s703
        $region60: #{tpu_custom_call.1} parent=43 // pred_fallthru
          _
        // Predicated region
        $region61: #{tpu_custom_call.1} parent=43 // pred_check
          %p738 = pneg %p234
        $region62: #{tpu_custom_call.1} parent=43 // pred_check_branch
          %740 = sbr.rel (%p738) target = $region64
        $region63: #{tpu_custom_call.1} parent=43 // pred_region
          %s742 = ssub.s32 128, 128
          %743 = vsyncadd %s708, %s742
          %s744 = smul.addr %s28, 128
          %s745 = scalar_lea.hbm %s8, %s744
          %s747 = sshll.u32 %s711, 4
          %s748 = int_to_ptr.vmem [resolvable:$true] %s747
          %750 = dma.vmem_to_hbm [thread:$0]  %s748, 128, %s745, %s708
        $region64: #{tpu_custom_call.1} parent=43 // pred_fallthru
          _
      $region44: #{tpu_custom_call.1} parent=5 // pred_fallthru
        _
      %p751 = scmp.le.s32.totalorder 2, %s23
      // Predicated region
      $region65: #{tpu_custom_call.1} parent=5 // pred_check
        %p752 = pneg %p751
      $region66: #{tpu_custom_call.1} parent=5 // pred_check_branch
        %754 = sbr.rel (%p752) target = $region68
      $region67: #{tpu_custom_call.1} parent=5 // pred_region
        %s755 = ssub.s32 %s23, 2
        // Predicated region
        $region69: #{tpu_custom_call.1} parent=67 // pred_check
          %p756 = pneg %p188
        $region70: #{tpu_custom_call.1} parent=67 // pred_check_branch
          %758 = sbr.rel (%p756) target = $region72
        $region71: #{tpu_custom_call.1} parent=67 // pred_region
          %s759 = sand.u32 %s173, 1
          %s760 = scalar_lea.sflag [#allocation4], %s759
          %s761 = sand.u32 %s173, 1
          %s762 = smul.addr %s761, 8
          %s763 = scalar_lea.vmem [#allocation7], %s762
          %764 = dma.done %s760, 128
        $region72: #{tpu_custom_call.1} parent=67 // pred_fallthru
          _
        // Predicated region
        $region73: #{tpu_custom_call.1} parent=67 // pred_check
          %p765 = pneg %p214
        $region74: #{tpu_custom_call.1} parent=67 // pred_check_branch
          %767 = sbr.rel (%p765) target = $region76
        $region75: #{tpu_custom_call.1} parent=67 // pred_region
          %s768 = sand.u32 %s29, 1
          %s769 = scalar_lea.sflag [#allocation9], %s768
          %s770 = sand.u32 %s199, 1
          %s771 = smul.addr %s770, 8
          %s772 = scalar_lea.vmem [#allocation8], %s771
          %773 = dma.done %s769, 128
        $region76: #{tpu_custom_call.1} parent=67 // pred_fallthru
          _
        // Predicated region
        $region77: #{tpu_custom_call.1} parent=67 // pred_check
          %p774 = pneg %p240
        $region78: #{tpu_custom_call.1} parent=67 // pred_check_branch
          %776 = sbr.rel (%p774) target = $region80
        $region79: #{tpu_custom_call.1} parent=67 // pred_region
          %s777 = sand.u32 %s29, 1
          %s778 = scalar_lea.sflag [#allocation9], %s777
          %s779 = sand.u32 %s225, 1
          %s780 = smul.addr %s779, 8
          %s781 = scalar_lea.vmem [#allocation10], %s780
          %782 = dma.done %s778, 128
        $region80: #{tpu_custom_call.1} parent=67 // pred_fallthru
          _
      $region68: #{tpu_custom_call.1} parent=5 // pred_fallthru
        _
    $region6: #{tpu_custom_call.1} parent=1 // loop_footer
      %s27 = sadd.s32 1, %s23
    $region7: #{tpu_custom_call.1} parent=1 // loop_footer_branch
      %22 = sbr.rel target = $region3
    $region8: #{tpu_custom_call.1} parent=1 // loop_exit
      _
    %783 = vsyncpa [#allocation3], 1
    %s784 = scalar_lea.sflag [#allocation3], 1
    %785 = vsyncpa %s784, 1
    %786 = vsyncpa [#allocation6], 1
    %787 = vsyncpa [#allocation4], 1
    %s788 = scalar_lea.sflag [#allocation4], 1
    %789 = vsyncpa %s788, 1
    %790 = vsyncpa [#allocation9], 1
    %s791 = scalar_lea.sflag [#allocation9], 1
    %792 = vsyncpa %s791, 1

// kernel: tpu_custom_call.1
$region0: #{tpu_custom_call.1}
  #allocation0 [shape = 'u32[]', space=smem, size = 0x4, offset = 0x4, fixed_abs, tag = 'smem constant byte address 0x4 - core index']
  #allocation1 [shape = 'u32[144,128]{1,0:T(1,128)}', space=vmem, size = 0x12000, scoped, tag = 'internal scratch']
  %s0 = inlined_call_operand.vmem [shape: f32[16,128], index: 0, kind: input, shape index: {}]
  %s1 = inlined_call_operand.vmem [shape: f32[16,1], index: 1, kind: input, shape index: {}]
  %s2 = inlined_call_operand.hbm [shape: f32[128,128], index: 2, kind: input, shape index: {}]
  %s3 = inlined_call_operand.vmem [shape: f32[1,128], index: 3, kind: input, shape index: {}]
  %s4 = inlined_call_operand.hbm [shape: f32[128,384], index: 4, kind: input, shape index: {}]
  %s5 = inlined_call_operand.vmem [shape: f32[1,384], index: 5, kind: input, shape index: {}]
  %s6 = inlined_call_operand.hbm [shape: f32[16,128], index: 6, kind: output, shape index: {0}]
  %s7 = inlined_call_operand.hbm [shape: f32[16,128], index: 7, kind: output, shape index: {1}]
  %s8 = inlined_call_operand.hbm [shape: f32[16,128], index: 8, kind: output, shape index: {2}]
  %9 = xla_tuple %s6, %s7, %s8
  %s10 = sld [smem:[#allocation0]]
  $region81: #{tpu_custom_call.1} parent=0
    _
  %s12 = ssub.s32 1, %s10
  %s13 = scalar_select 0, %s12, %s10
  $region1: #{tpu_custom_call.1} parent=0
    #allocation2 [shape = 'u8[65536]{0}', space=vmem, size = 0x10000, scoped, tag = 'input window, operand 2, single buffered']
    #allocation3 [shape = 's32[2]{0}', space=sflag, size = 0x8, scoped, tag = 'scoped memory for tpu_custom_call.1']
    #allocation4 [shape = 's32[2]{0}', space=sflag, size = 0x8, scoped, tag = 'scoped memory for tpu_custom_call.1']
    #allocation5 [shape = 'u8[196608]{0}', space=vmem, size = 0x30000, scoped, tag = 'input window, operand 4, single buffered']
    #allocation6 [shape = 's32[1]{0}', space=sflag, size = 0x4, scoped, tag = 'scoped memory for tpu_custom_call.1']
    #allocation7 [shape = 'u8[8192]{0}', space=vmem, size = 0x2000, scoped, tag = 'output window, operand 0']
    #allocation8 [shape = 'u8[8192]{0}', space=vmem, size = 0x2000, scoped, tag = 'output window, operand 1']
    #allocation9 [shape = 's32[2]{0}', space=sflag, size = 0x8, scoped, tag = 'scoped memory for tpu_custom_call.1']
    #allocation10 [shape = 'u8[8192]{0}', space=vmem, size = 0x2000, scoped, tag = 'output window, operand 2']
    %14 = vsyncpa [#allocation3], 0
    %15 = vsyncpa [#allocation6], 0
    %16 = vsyncpa [#allocation4], 0
    %s17 = scalar_lea.sflag [#allocation4], 1
    %18 = vsyncpa %s17, 0
    %19 = vsyncpa [#allocation9], 0
    %s20 = scalar_lea.sflag [#allocation9], 1
    %21 = vsyncpa %s20, 0
    loop: start=0, step=1, limit=4
    $region2: #{tpu_custom_call.1} parent=1 // loop_pre_header
      _
    $region3: #{tpu_custom_call.1} parent=1 // loop_header
      %s23 = sphi 0, %s27
      %p24 = scmp.ge.s32.totalorder %s23, 4
      %s33 = sphi 0, %s35
      %s36 = sphi 0, %s33
      %s37 = sphi 0, %s36
      %s53 = sphi 0, %s37
      %s59 = sphi 0, %s61
      %s62 = sphi 0, %s59
      %s63 = sphi 0, %s62
      %s79 = sphi 0, %s63
      %s83 = sphi 0, %s83
      %s85 = sphi 0, %s83
      %s86 = sphi 0, %s85
      %s100 = sphi 0, %s86
      %s104 = sphi 0, %s104
      %s106 = sphi 0, %s104
      %s107 = sphi 0, %s106
      %s121 = sphi 0, %s107
      %s125 = sphi 0, %s125
      %s127 = sphi 0, %s125
      %s128 = sphi 0, %s127
      %s142 = sphi 0, %s128
      %s146 = sphi 0, %s146
      %s148 = sphi 0, %s146
      %s149 = sphi 0, %s148
      %s163 = sphi 0, %s149
      %s169 = sphi 0, %s171
      %s172 = sphi 0, %s169
      %s173 = sphi 0, %s172
      %s189 = sphi 0, %s173
      %s195 = sphi 0, %s197
      %s198 = sphi 0, %s195
      %s199 = sphi 0, %s198
      %s215 = sphi 0, %s199
      %s221 = sphi 0, %s223
      %s224 = sphi 0, %s221
      %s225 = sphi 0, %s224
      %s241 = sphi 0, %s225
    $region4: #{tpu_custom_call.1} parent=1 // loop_header_branch
      %26 = sbr.rel (%p24) target = $region8
    $region5: #{tpu_custom_call.1} parent=1 // loop_body
      %s28 = ssub.s32 %s23, 1
      %s29 = ssub.s32 %s23, 2
      %s30 = sadd.s32 %s23, 1
      %s31 = ssub.s32 %s23, %s30
      %p32 = scmp.eq.s32.totalorder %s31, 0
      %s34 = sadd.s32 %s33, 1
      %s35 = scalar_select %p32, %s33, %s34
      %p38 = pneg %p32
      %p39 = scmp.eq.s32.totalorder %s23, 1
      %p40 = por %p38, %p39
      %p41 = scmp.ne.s32.totalorder %s33, %s36
      %p42 = scmp.eq.s32.totalorder %s23, 0
      %p43 = por %p41, %p42
      %p44 = scmp.ne.s32.totalorder %s33, %s36
      %p45 = scmp.eq.s32.totalorder %s28, 1
      %p46 = por %p44, %p45
      %p47 = scmp.ne.s32.totalorder %s36, %s37
      %p48 = scmp.eq.s32.totalorder %s28, 0
      %p49 = por %p47, %p48
      %p50 = scmp.ne.s32.totalorder %s36, %s37
      %p51 = scmp.eq.s32.totalorder %s29, 1
      %p52 = por %p50, %p51
      %p54 = scmp.ne.s32.totalorder %s37, %s53
      %p55 = scmp.eq.s32.totalorder %s29, 0
      %p56 = por %p54, %p55
      %s57 = ssub.s32 %s23, %s30
      %p58 = scmp.eq.s32.totalorder %s57, 0
      %s60 = sadd.s32 %s59, 1
      %s61 = scalar_select %p58, %s59, %s60
      %p64 = pneg %p58
      %p65 = scmp.eq.s32.totalorder %s23, 1
      %p66 = por %p64, %p65
      %p67 = scmp.ne.s32.totalorder %s59, %s62
      %p68 = scmp.eq.s32.totalorder %s23, 0
      %p69 = por %p67, %p68
      %p70 = scmp.ne.s32.totalorder %s59, %s62
      %p71 = scmp.eq.s32.totalorder %s28, 1
      %p72 = por %p70, %p71
      %p73 = scmp.ne.s32.totalorder %s62, %s63
      %p74 = scmp.eq.s32.totalorder %s28, 0
      %p75 = por %p73, %p74
      %p76 = scmp.ne.s32.totalorder %s62, %s63
      %p77 = scmp.eq.s32.totalorder %s29, 1
      %p78 = por %p76, %p77
      %p80 = scmp.ne.s32.totalorder %s63, %s79
      %p81 = scmp.eq.s32.totalorder %s29, 0
      %p82 = por %p80, %p81
      %s84 = sadd.s32 %s83, 1
      %p87 = scmp.eq.s32.totalorder %s23, 1
      %p88 = scmp.ne.s32.totalorder %s83, %s85
      %p89 = scmp.eq.s32.totalorder %s23, 0
      %p90 = por %p88, %p89
      %p91 = scmp.ne.s32.totalorder %s83, %s85
      %p92 = scmp.eq.s32.totalorder %s28, 1
      %p93 = por %p91, %p92
      %p94 = scmp.ne.s32.totalorder %s85, %s86
      %p95 = scmp.eq.s32.totalorder %s28, 0
      %p96 = por %p94, %p95
      %p97 = scmp.ne.s32.totalorder %s85, %s86
      %p98 = scmp.eq.s32.totalorder %s29, 1
      %p99 = por %p97, %p98
      %p101 = scmp.ne.s32.totalorder %s86, %s100
      %p102 = scmp.eq.s32.totalorder %s29, 0
      %p103 = por %p101, %p102
      %s105 = sadd.s32 %s104, 1
      %p108 = scmp.eq.s32.totalorder %s23, 1
      %p109 = scmp.ne.s32.totalorder %s104, %s106
      %p110 = scmp.eq.s32.totalorder %s23, 0
      %p111 = por %p109, %p110
      %p112 = scmp.ne.s32.totalorder %s104, %s106
      %p113 = scmp.eq.s32.totalorder %s28, 1
      %p114 = por %p112, %p113
      %p115 = scmp.ne.s32.totalorder %s106, %s107
      %p116 = scmp.eq.s32.totalorder %s28, 0
      %p117 = por %p115, %p116
      %p118 = scmp.ne.s32.totalorder %s106, %s107
      %p119 = scmp.eq.s32.totalorder %s29, 1
      %p120 = por %p118, %p119
      %p122 = scmp.ne.s32.totalorder %s107, %s121
      %p123 = scmp.eq.s32.totalorder %s29, 0
      %p124 = por %p122, %p123
      %s126 = sadd.s32 %s125, 1
      %p129 = scmp.eq.s32.totalorder %s23, 1
      %p130 = scmp.ne.s32.totalorder %s125, %s127
      %p131 = scmp.eq.s32.totalorder %s23, 0
      %p132 = por %p130, %p131
      %p133 = scmp.ne.s32.totalorder %s125, %s127
      %p134 = scmp.eq.s32.totalorder %s28, 1
      %p135 = por %p133, %p134
      %p136 = scmp.ne.s32.totalorder %s127, %s128
      %p137 = scmp.eq.s32.totalorder %s28, 0
      %p138 = por %p136, %p137
      %p139 = scmp.ne.s32.totalorder %s127, %s128
      %p140 = scmp.eq.s32.totalorder %s29, 1
      %p141 = por %p139, %p140
      %p143 = scmp.ne.s32.totalorder %s128, %s142
      %p144 = scmp.eq.s32.totalorder %s29, 0
      %p145 = por %p143, %p144
      %s147 = sadd.s32 %s146, 1
      %p150 = scmp.eq.s32.totalorder %s23, 1
      %p151 = scmp.ne.s32.totalorder %s146, %s148
      %p152 = scmp.eq.s32.totalorder %s23, 0
      %p153 = por %p151, %p152
      %p154 = scmp.ne.s32.totalorder %s146, %s148
      %p155 = scmp.eq.s32.totalorder %s28, 1
      %p156 = por %p154, %p155
      %p157 = scmp.ne.s32.totalorder %s148, %s149
      %p158 = scmp.eq.s32.totalorder %s28, 0
      %p159 = por %p157, %p158
      %p160 = scmp.ne.s32.totalorder %s148, %s149
      %p161 = scmp.eq.s32.totalorder %s29, 1
      %p162 = por %p160, %p161
      %p164 = scmp.ne.s32.totalorder %s149, %s163
      %p165 = scmp.eq.s32.totalorder %s29, 0
      %p166 = por %p164, %p165
      %s167 = ssub.s32 %s23, %s30
      %p168 = scmp.eq.s32.totalorder %s167, 0
      %s170 = sadd.s32 %s169, 1
      %s171 = scalar_select %p168, %s169, %s170
      %p174 = pneg %p168
      %p175 = scmp.eq.s32.totalorder %s23, 1
      %p176 = por %p174, %p175
      %p177 = scmp.ne.s32.totalorder %s169, %s172
      %p178 = scmp.eq.s32.totalorder %s23, 0
      %p179 = por %p177, %p178
      %p180 = scmp.ne.s32.totalorder %s169, %s172
      %p181 = scmp.eq.s32.totalorder %s28, 1
      %p182 = por %p180, %p181
      %p183 = scmp.ne.s32.totalorder %s172, %s173
      %p184 = scmp.eq.s32.totalorder %s28, 0
      %p185 = por %p183, %p184
      %p186 = scmp.ne.s32.totalorder %s172, %s173
      %p187 = scmp.eq.s32.totalorder %s29, 1
      %p188 = por %p186, %p187
      %p190 = scmp.ne.s32.totalorder %s173, %s189
      %p191 = scmp.eq.s32.totalorder %s29, 0
      %p192 = por %p190, %p191
      %s193 = ssub.s32 %s23, %s30
      %p194 = scmp.eq.s32.totalorder %s193, 0
      %s196 = sadd.s32 %s195, 1
      %s197 = scalar_select %p194, %s195, %s196
      %p200 = pneg %p194
      %p201 = scmp.eq.s32.totalorder %s23, 1
      %p202 = por %p200, %p201
      %p203 = scmp.ne.s32.totalorder %s195, %s198
      %p204 = scmp.eq.s32.totalorder %s23, 0
      %p205 = por %p203, %p204
      %p206 = scmp.ne.s32.totalorder %s195, %s198
      %p207 = scmp.eq.s32.totalorder %s28, 1
      %p208 = por %p206, %p207
      %p209 = scmp.ne.s32.totalorder %s198, %s199
      %p210 = scmp.eq.s32.totalorder %s28, 0
      %p211 = por %p209, %p210
      %p212 = scmp.ne.s32.totalorder %s198, %s199
      %p213 = scmp.eq.s32.totalorder %s29, 1
      %p214 = por %p212, %p213
      %p216 = scmp.ne.s32.totalorder %s199, %s215
      %p217 = scmp.eq.s32.totalorder %s29, 0
      %p218 = por %p216, %p217
      %s219 = ssub.s32 %s23, %s30
      %p220 = scmp.eq.s32.totalorder %s219, 0
      %s222 = sadd.s32 %s221, 1
      %s223 = scalar_select %p220, %s221, %s222
      %p226 = pneg %p220
      %p227 = scmp.eq.s32.totalorder %s23, 1
      %p228 = por %p226, %p227
      %p229 = scmp.ne.s32.totalorder %s221, %s224
      %p230 = scmp.eq.s32.totalorder %s23, 0
      %p231 = por %p229, %p230
      %p232 = scmp.ne.s32.totalorder %s221, %s224
      %p233 = scmp.eq.s32.totalorder %s28, 1
      %p234 = por %p232, %p233
      %p235 = scmp.ne.s32.totalorder %s224, %s225
      %p236 = scmp.eq.s32.totalorder %s28, 0
      %p237 = por %p235, %p236
      %p238 = scmp.ne.s32.totalorder %s224, %s225
      %p239 = scmp.eq.s32.totalorder %s29, 1
      %p240 = por %p238, %p239
      %p242 = scmp.ne.s32.totalorder %s225, %s241
      %p243 = scmp.eq.s32.totalorder %s29, 0
      %p244 = por %p242, %p243
      %p245 = scmp.le.s32.totalorder 1, %s23
      %p246 = scmp.lt.s32.totalorder %s23, 3
      %p247 = pnand %p245, %p246
      %p248 = pneg %p247
      // Predicated region
      $region9: #{tpu_custom_call.1} parent=5 // pred_check
        _
      $region10: #{tpu_custom_call.1} parent=5 // pred_check_branch
        %250 = sbr.rel (%p247) target = $region12
      $region11: #{tpu_custom_call.1} parent=5 // pred_region
        %s251 = ssub.s32 %s23, 1
        // Predicated region
        $region13: #{tpu_custom_call.1} parent=11 // pred_check
          %p252 = pneg %p96
        $region14: #{tpu_custom_call.1} parent=11 // pred_check_branch
          %254 = sbr.rel (%p252) target = $region16
        $region15: #{tpu_custom_call.1} parent=11 // pred_region
          %s256 = ssub.s32 2048, 2048
          %257 = vsyncadd [#allocation3], %s256
          %s258 = sshll.u32 [#allocation2], 4
          %s259 = int_to_ptr.vmem [resolvable:$true] %s258
          %264 = dma.hbm_to_vmem [thread:$0]  %s2, 2048, %s259, [#allocation3], 128, 128, 8
        $region16: #{tpu_custom_call.1} parent=11 // pred_fallthru
          _
        // Predicated region
        $region17: #{tpu_custom_call.1} parent=11 // pred_check
          %p265 = pneg %p117
        $region18: #{tpu_custom_call.1} parent=11 // pred_check_branch
          %267 = sbr.rel (%p265) target = $region20
        $region19: #{tpu_custom_call.1} parent=11 // pred_region
          _
        $region20: #{tpu_custom_call.1} parent=11 // pred_fallthru
          _
        // Predicated region
        $region21: #{tpu_custom_call.1} parent=11 // pred_check
          %p268 = pneg %p138
        $region22: #{tpu_custom_call.1} parent=11 // pred_check_branch
          %270 = sbr.rel (%p268) target = $region24
        $region23: #{tpu_custom_call.1} parent=11 // pred_region
          %s272 = ssub.s32 6144, 6144
          %273 = vsyncadd [#allocation6], %s272
          %s274 = sshll.u32 [#allocation5], 4
          %s275 = int_to_ptr.vmem [resolvable:$true] %s274
          %280 = dma.hbm_to_vmem [thread:$0]  %s4, 6144, %s275, [#allocation6], 384, 384, 24
        $region24: #{tpu_custom_call.1} parent=11 // pred_fallthru
          _
        // Predicated region
        $region25: #{tpu_custom_call.1} parent=11 // pred_check
          %p281 = pneg %p159
        $region26: #{tpu_custom_call.1} parent=11 // pred_check_branch
          %283 = sbr.rel (%p281) target = $region28
        $region27: #{tpu_custom_call.1} parent=11 // pred_region
          _
        $region28: #{tpu_custom_call.1} parent=11 // pred_fallthru
          _
      $region12: #{tpu_custom_call.1} parent=5 // pred_fallthru
        _
      %p284 = scmp.lt.s32.totalorder %s23, 2
      // Predicated region
      $region29: #{tpu_custom_call.1} parent=5 // pred_check
        %p285 = pneg %p284
      $region30: #{tpu_custom_call.1} parent=5 // pred_check_branch
        %287 = sbr.rel (%p285) target = $region32
      $region31: #{tpu_custom_call.1} parent=5 // pred_region
        // Predicated region
        $region33: #{tpu_custom_call.1} parent=31 // pred_check
          %p288 = pneg %p43
        $region34: #{tpu_custom_call.1} parent=31 // pred_check_branch
          %290 = sbr.rel (%p288) target = $region36
        $region35: #{tpu_custom_call.1} parent=31 // pred_region
          %p291 = scmp.lt.s32.totalorder %s23, 1
          %s292 = scalar_select %p291, %s23, 1
          %s293 = smul.addr %s292, 8
          %s294 = scalar_lea.vmem %s0, %s293
        $region36: #{tpu_custom_call.1} parent=31 // pred_fallthru
          _
        // Predicated region
        $region37: #{tpu_custom_call.1} parent=31 // pred_check
          %p295 = pneg %p69
        $region38: #{tpu_custom_call.1} parent=31 // pred_check_branch
          %297 = sbr.rel (%p295) target = $region40
        $region39: #{tpu_custom_call.1} parent=31 // pred_region
          %p298 = scmp.lt.s32.totalorder %s23, 1
          %s299 = scalar_select %p298, %s23, 1
          %s300 = smul.addr %s299, 8
          %s301 = scalar_lea.vmem %s1, %s300
        $region40: #{tpu_custom_call.1} parent=31 // pred_fallthru
          _
      $region32: #{tpu_custom_call.1} parent=5 // pred_fallthru
        _
      %p302 = scmp.le.s32.totalorder 1, %s23
      %p303 = scmp.lt.s32.totalorder %s23, 3
      %p304 = pnand %p302, %p303
      %p305 = pneg %p304
      // Predicated region
      $region41: #{tpu_custom_call.1} parent=5 // pred_check
        _
      $region42: #{tpu_custom_call.1} parent=5 // pred_check_branch
        %307 = sbr.rel (%p304) target = $region44
      $region43: #{tpu_custom_call.1} parent=5 // pred_region
        %s308 = ssub.s32 %s23, 1
        // Predicated region
        $region45: #{tpu_custom_call.1} parent=43 // pred_check
          %p309 = pneg %p96
        $region46: #{tpu_custom_call.1} parent=43 // pred_check_branch
          %311 = sbr.rel (%p309) target = $region48
        $region47: #{tpu_custom_call.1} parent=43 // pred_region
          %312 = dma.done [#allocation3], 2048
        $region48: #{tpu_custom_call.1} parent=43 // pred_fallthru
          _
        // Predicated region
        $region49: #{tpu_custom_call.1} parent=43 // pred_check
          %p313 = pneg %p138
        $region50: #{tpu_custom_call.1} parent=43 // pred_check_branch
          %315 = sbr.rel (%p313) target = $region52
        $region51: #{tpu_custom_call.1} parent=43 // pred_region
          %316 = dma.done [#allocation6], 6144
        $region52: #{tpu_custom_call.1} parent=43 // pred_fallthru
          _
        %p317 = scmp.lt.s32.totalorder %s28, 1
        %s318 = scalar_select %p317, %s28, 1
        %s319 = smul.addr %s318, 8
        %s320 = scalar_lea.vmem %s0, %s319
        %p321 = pneg %p49
        %p322 = pneg %p46
        %p323 = scmp.lt.s32.totalorder %s28, 1
        %s324 = scalar_select %p323, %s28, 1
        %s325 = smul.addr %s324, 8
        %s326 = scalar_lea.vmem %s1, %s325
        %p327 = pneg %p75
        %p328 = pneg %p72
        %p329 = pneg %p96
        %p330 = pneg %p93
        %p331 = pneg %p117
        %p332 = pneg %p114
        %p333 = pneg %p138
        %p334 = pneg %p135
        %p335 = pneg %p159
        %p336 = pneg %p156
        %p337 = pneg %p185
        %p338 = pneg %p182
        %s339 = sand.u32 %s172, 1
        %s340 = scalar_lea.sflag [#allocation4], %s339
        %s341 = sand.u32 %s172, 1
        %s342 = smul.addr %s341, 8
        %s343 = scalar_lea.vmem [#allocation7], %s342
        %p344 = pneg %p211
        %p345 = pneg %p208
        %s346 = sand.u32 %s28, 1
        %s347 = scalar_lea.sflag [#allocation9], %s346
        %s348 = sand.u32 %s198, 1
        %s349 = smul.addr %s348, 8
        %s350 = scalar_lea.vmem [#allocation8], %s349
        %p351 = pneg %p237
        %p352 = pneg %p234
        %s353 = sand.u32 %s28, 1
        %s354 = scalar_lea.sflag [#allocation9], %s353
        %s355 = sand.u32 %s224, 1
        %s356 = smul.addr %s355, 8
        %s357 = scalar_lea.vmem [#allocation10], %s356
        %p358 = scmp.lt.s32.totalorder %s28, 1
        %s359 = scalar_select %p358, %s28, 1
        %s360 = smul.addr %s359, 8
        %s361 = scalar_lea.vmem %s0, %s360
        %p362 = scmp.lt.s32.totalorder %s28, 1
        %s363 = scalar_select %p362, %s28, 1
        %s364 = smul.addr %s363, 8
        %s365 = scalar_lea.vmem %s1, %s364
        %v366 = vld [vmem:[%s361] sm:$0xff]
        %v367 = vld [vmem:[#allocation2] sm:$0xff]
        %v368 = vld [vmem:[#allocation2 + $0x8] sm:$0xff]
        %v369 = vld [vmem:[#allocation2 + $0x10] sm:$0xff]
        %v370 = vld [vmem:[#allocation2 + $0x18] sm:$0xff]
        %v371 = vld [vmem:[#allocation2 + $0x20] sm:$0xff]
        %v372 = vld [vmem:[#allocation2 + $0x28] sm:$0xff]
        %v373 = vld [vmem:[#allocation2 + $0x30] sm:$0xff]
        %v374 = vld [vmem:[#allocation2 + $0x38] sm:$0xff]
        %v375 = vld [vmem:[#allocation2 + $0x40] sm:$0xff]
        %v376 = vld [vmem:[#allocation2 + $0x48] sm:$0xff]
        %v377 = vld [vmem:[#allocation2 + $0x50] sm:$0xff]
        %v378 = vld [vmem:[#allocation2 + $0x58] sm:$0xff]
        %v379 = vld [vmem:[#allocation2 + $0x60] sm:$0xff]
        %v380 = vld [vmem:[#allocation2 + $0x68] sm:$0xff]
        %v381 = vld [vmem:[#allocation2 + $0x70] sm:$0xff]
        %v382 = vld [vmem:[#allocation2 + $0x78] sm:$0xff]
        %v383 = vld [vmem:[%s3] sm:$0x1]
        %v385 = vlaneseq
        %v386 = vshrl.u32 %v385, 7
        %v387 = vsub.s32 0, %v386
        %v388 = vrot.slane %v383, %v387
        %390 = vmatprep.subr.mxu0 0.0
        %391 = vmatpush1.msra.mxu0 %v382
        %392 = vmatprep.subr.mxu0 0.0
        %393 = vmatpush1.msra.mxu0 %v381
        %394 = vmatprep.subr.mxu0 0.0
        %395 = vmatpush1.msra.mxu0 %v380
        %396 = vmatprep.subr.mxu0 0.0
        %397 = vmatpush1.msra.mxu0 %v379
        %398 = vmatprep.subr.mxu0 0.0
        %399 = vmatpush1.msra.mxu0 %v378
        %400 = vmatprep.subr.mxu0 0.0
        %401 = vmatpush1.msra.mxu0 %v377
        %402 = vmatprep.subr.mxu0 0.0
        %403 = vmatpush1.msra.mxu0 %v376
        %404 = vmatprep.subr.mxu0 0.0
        %405 = vmatpush1.msra.mxu0 %v375
        %406 = vmatprep.subr.mxu0 0.0
        %407 = vmatpush1.msra.mxu0 %v374
        %408 = vmatprep.subr.mxu0 0.0
        %409 = vmatpush1.msra.mxu0 %v373
        %410 = vmatprep.subr.mxu0 0.0
        %411 = vmatpush1.msra.mxu0 %v372
        %412 = vmatprep.subr.mxu0 0.0
        %413 = vmatpush1.msra.mxu0 %v371
        %414 = vmatprep.subr.mxu0 0.0
        %415 = vmatpush1.msra.mxu0 %v370
        %416 = vmatprep.subr.mxu0 0.0
        %417 = vmatpush1.msra.mxu0 %v369
        %418 = vmatprep.subr.mxu0 0.0
        %419 = vmatpush1.msra.mxu0 %v368
        %420 = vmatprep.subr.mxu0 0.0
        %421 = vmatpush1.msra.mxu0 %v367
        %422 = vmatprep.subr.mxu0 0.0
        %423 = vmatpush2.msra.mxu0 0.0
        %424 = vmatprep.subr.mxu0 0.0
        %425 = vmatpush2.msra.mxu0 0.0
        %426 = vmatprep.subr.mxu0 0.0
        %427 = vmatpush2.msra.mxu0 0.0
        %428 = vmatprep.subr.mxu0 0.0
        %429 = vmatpush2.msra.mxu0 0.0
        %430 = vmatprep.subr.mxu0 0.0
        %431 = vmatpush2.msra.mxu0 0.0
        %432 = vmatprep.subr.mxu0 0.0
        %433 = vmatpush2.msra.mxu0 0.0
        %434 = vmatprep.subr.mxu0 0.0
        %435 = vmatpush2.msra.mxu0 0.0
        %436 = vmatprep.subr.mxu0 0.0
        %437 = vmatpush2.msra.mxu0 0.0
        %438 = vmatprep.subr.mxu0 0.0
        %439 = vmatpush2.msra.mxu0 0.0
        %440 = vmatprep.subr.mxu0 0.0
        %441 = vmatpush2.msra.mxu0 0.0
        %442 = vmatprep.subr.mxu0 0.0
        %443 = vmatpush2.msra.mxu0 0.0
        %444 = vmatprep.subr.mxu0 0.0
        %445 = vmatpush2.msra.mxu0 0.0
        %446 = vmatprep.subr.mxu0 0.0
        %447 = vmatpush2.msra.mxu0 0.0
        %448 = vmatprep.subr.mxu0 0.0
        %449 = vmatpush2.msra.mxu0 0.0
        %450 = vmatprep.subr.mxu0 0.0
        %451 = vmatpush2.msra.mxu0 0.0
        %452 = vmatprep.subr.mxu0 0.0
        %453 = vmatpush2.msra.mxu0 0.0
        %454 = vmatprep.mubr.f32.mxu0 0.0
        %455 = vmatmul.mubr.f32.gmra.mxu0 %v366
        %v456 = vpop.f32.mrf.mxu0
        %v457 = vadd.f32 %v388, %v456
        %v458 = vpop.f32.mrf.mxu0
        %459 = vdwg.mxu0
        %v460 = vmax.f32 %v457, 0.0
        %v461 = vld [vmem:[#allocation5] sm:$0xff]
        %v462 = vld [vmem:[#allocation5 + $0x8] sm:$0xff]
        %v463 = vld [vmem:[#allocation5 + $0x10] sm:$0xff]
        %v464 = vld [vmem:[#allocation5 + $0x18] sm:$0xff]
        %v465 = vld [vmem:[#allocation5 + $0x20] sm:$0xff]
        %v466 = vld [vmem:[#allocation5 + $0x28] sm:$0xff]
        %v467 = vld [vmem:[#allocation5 + $0x30] sm:$0xff]
        %v468 = vld [vmem:[#allocation5 + $0x38] sm:$0xff]
        %v469 = vld [vmem:[#allocation5 + $0x40] sm:$0xff]
        %v470 = vld [vmem:[#allocation5 + $0x48] sm:$0xff]
        %v471 = vld [vmem:[#allocation5 + $0x50] sm:$0xff]
        %v472 = vld [vmem:[#allocation5 + $0x58] sm:$0xff]
        %v473 = vld [vmem:[#allocation5 + $0x60] sm:$0xff]
        %v474 = vld [vmem:[#allocation5 + $0x68] sm:$0xff]
        %v475 = vld [vmem:[#allocation5 + $0x70] sm:$0xff]
        %v476 = vld [vmem:[#allocation5 + $0x78] sm:$0xff]
        %v477 = vld [vmem:[#allocation5 + $0x80] sm:$0xff]
        %v478 = vld [vmem:[#allocation5 + $0x88] sm:$0xff]
        %v479 = vld [vmem:[#allocation5 + $0x90] sm:$0xff]
        %v480 = vld [vmem:[#allocation5 + $0x98] sm:$0xff]
        %v481 = vld [vmem:[#allocation5 + $0xa0] sm:$0xff]
        %v482 = vld [vmem:[#allocation5 + $0xa8] sm:$0xff]
        %v483 = vld [vmem:[#allocation5 + $0xb0] sm:$0xff]
        %v484 = vld [vmem:[#allocation5 + $0xb8] sm:$0xff]
        %v485 = vld [vmem:[#allocation5 + $0xc0] sm:$0xff]
        %v486 = vld [vmem:[#allocation5 + $0xc8] sm:$0xff]
        %v487 = vld [vmem:[#allocation5 + $0xd0] sm:$0xff]
        %v488 = vld [vmem:[#allocation5 + $0xd8] sm:$0xff]
        %v489 = vld [vmem:[#allocation5 + $0xe0] sm:$0xff]
        %v490 = vld [vmem:[#allocation5 + $0xe8] sm:$0xff]
        %v491 = vld [vmem:[#allocation5 + $0xf0] sm:$0xff]
        %v492 = vld [vmem:[#allocation5 + $0xf8] sm:$0xff]
        %v493 = vld [vmem:[#allocation5 + $0x100] sm:$0xff]
        %v494 = vld [vmem:[#allocation5 + $0x108] sm:$0xff]
        %v495 = vld [vmem:[#allocation5 + $0x110] sm:$0xff]
        %v496 = vld [vmem:[#allocation5 + $0x118] sm:$0xff]
        %v497 = vld [vmem:[#allocation5 + $0x120] sm:$0xff]
        %v498 = vld [vmem:[#allocation5 + $0x128] sm:$0xff]
        %v499 = vld [vmem:[#allocation5 + $0x130] sm:$0xff]
        %v500 = vld [vmem:[#allocation5 + $0x138] sm:$0xff]
        %v501 = vld [vmem:[#allocation5 + $0x140] sm:$0xff]
        %v502 = vld [vmem:[#allocation5 + $0x148] sm:$0xff]
        %v503 = vld [vmem:[#allocation5 + $0x150] sm:$0xff]
        %v504 = vld [vmem:[#allocation5 + $0x158] sm:$0xff]
        %v505 = vld [vmem:[#allocation5 + $0x160] sm:$0xff]
        %v506 = vld [vmem:[#allocation5 + $0x168] sm:$0xff]
        %v507 = vld [vmem:[#allocation5 + $0x170] sm:$0xff]
        %v508 = vld [vmem:[#allocation5 + $0x178] sm:$0xff]
        %v509 = vld [vmem:[%s5] sm:$0x7]
        %v511 = vlaneseq
        %v512 = vshrl.u32 %v511, 7
        %v513 = vsub.s32 0, %v512
        %v514 = vrot.slane %v509, %v513
        %v515 = vlaneseq
        %v516 = vshrl.u32 %v515, 7
        %v517 = vsub.s32 1, %v516
        %v518 = vrot.slane %v509, %v517
        %v519 = vlaneseq
        %v520 = vshrl.u32 %v519, 7
        %v521 = vsub.s32 2, %v520
        %v522 = vrot.slane %v509, %v521
        %526 = vmatprep.subr.mxu0 %v507
        %527 = vmatpush1.msra.mxu0 %v506
        %528 = vmatprep.subr.mxu0 %v504
        %529 = vmatpush1.msra.mxu0 %v503
        %530 = vmatprep.subr.mxu0 %v501
        %531 = vmatpush1.msra.mxu0 %v500
        %532 = vmatprep.subr.mxu0 %v498
        %533 = vmatpush1.msra.mxu0 %v497
        %534 = vmatprep.subr.mxu0 %v495
        %535 = vmatpush1.msra.mxu0 %v494
        %536 = vmatprep.subr.mxu0 %v492
        %537 = vmatpush1.msra.mxu0 %v491
        %538 = vmatprep.subr.mxu0 %v489
        %539 = vmatpush1.msra.mxu0 %v488
        %540 = vmatprep.subr.mxu0 %v486
        %541 = vmatpush1.msra.mxu0 %v485
        %542 = vmatprep.subr.mxu0 %v483
        %543 = vmatpush1.msra.mxu0 %v482
        %544 = vmatprep.subr.mxu0 %v480
        %545 = vmatpush1.msra.mxu0 %v479
        %546 = vmatprep.subr.mxu0 %v477
        %547 = vmatpush1.msra.mxu0 %v476
        %548 = vmatprep.subr.mxu0 %v474
        %549 = vmatpush1.msra.mxu0 %v473
        %550 = vmatprep.subr.mxu0 %v471
        %551 = vmatpush1.msra.mxu0 %v470
        %552 = vmatprep.subr.mxu0 %v468
        %553 = vmatpush1.msra.mxu0 %v467
        %554 = vmatprep.subr.mxu0 %v465
        %555 = vmatpush1.msra.mxu0 %v464
        %556 = vmatprep.subr.mxu0 %v462
        %557 = vmatpush1.msra.mxu0 %v461
        %558 = vmatprep.subr.mxu0 0.0
        %559 = vmatpush2.msra.mxu0 0.0
        %560 = vmatprep.subr.mxu0 0.0
        %561 = vmatpush2.msra.mxu0 0.0
        %562 = vmatprep.subr.mxu0 0.0
        %563 = vmatpush2.msra.mxu0 0.0
        %564 = vmatprep.subr.mxu0 0.0
        %565 = vmatpush2.msra.mxu0 0.0
        %566 = vmatprep.subr.mxu0 0.0
        %567 = vmatpush2.msra.mxu0 0.0
        %568 = vmatprep.subr.mxu0 0.0
        %569 = vmatpush2.msra.mxu0 0.0
        %570 = vmatprep.subr.mxu0 0.0
        %571 = vmatpush2.msra.mxu0 0.0
        %572 = vmatprep.subr.mxu0 0.0
        %573 = vmatpush2.msra.mxu0 0.0
        %574 = vmatprep.subr.mxu0 0.0
        %575 = vmatpush2.msra.mxu0 0.0
        %576 = vmatprep.subr.mxu0 0.0
        %577 = vmatpush2.msra.mxu0 0.0
        %578 = vmatprep.subr.mxu0 0.0
        %579 = vmatpush2.msra.mxu0 0.0
        %580 = vmatprep.subr.mxu0 0.0
        %581 = vmatpush2.msra.mxu0 0.0
        %582 = vmatprep.subr.mxu0 0.0
        %583 = vmatpush2.msra.mxu0 0.0
        %584 = vmatprep.subr.mxu0 0.0
        %585 = vmatpush2.msra.mxu0 0.0
        %586 = vmatprep.subr.mxu0 0.0
        %587 = vmatpush2.msra.mxu0 0.0
        %588 = vmatprep.subr.mxu0 0.0
        %589 = vmatpush2.msra.mxu0 0.0
        %590 = vmatprep.mubr.f32.mxu0 0.0
        %591 = vmatmul.mubr.f32.gmra.mxu0 %v460
        %v592 = vpop.f32.mrf.mxu0
        %v593 = vadd.f32 %v514, %v592
        %v594 = vpop.f32.mrf.mxu0
        %v595 = vadd.f32 %v518, %v594
        %596 = vdwg.mxu0
        %597 = vmatprep.subr.mxu0 0.0
        %598 = vmatpush1.msra.mxu0 %v508
        %599 = vmatprep.subr.mxu0 0.0
        %600 = vmatpush1.msra.mxu0 %v505
        %601 = vmatprep.subr.mxu0 0.0
        %602 = vmatpush1.msra.mxu0 %v502
        %603 = vmatprep.subr.mxu0 0.0
        %604 = vmatpush1.msra.mxu0 %v499
        %605 = vmatprep.subr.mxu0 0.0
        %606 = vmatpush1.msra.mxu0 %v496
        %607 = vmatprep.subr.mxu0 0.0
        %608 = vmatpush1.msra.mxu0 %v493
        %609 = vmatprep.subr.mxu0 0.0
        %610 = vmatpush1.msra.mxu0 %v490
        %611 = vmatprep.subr.mxu0 0.0
        %612 = vmatpush1.msra.mxu0 %v487
        %613 = vmatprep.subr.mxu0 0.0
        %614 = vmatpush1.msra.mxu0 %v484
        %615 = vmatprep.subr.mxu0 0.0
        %616 = vmatpush1.msra.mxu0 %v481
        %617 = vmatprep.subr.mxu0 0.0
        %618 = vmatpush1.msra.mxu0 %v478
        %619 = vmatprep.subr.mxu0 0.0
        %620 = vmatpush1.msra.mxu0 %v475
        %621 = vmatprep.subr.mxu0 0.0
        %622 = vmatpush1.msra.mxu0 %v472
        %623 = vmatprep.subr.mxu0 0.0
        %624 = vmatpush1.msra.mxu0 %v469
        %625 = vmatprep.subr.mxu0 0.0
        %626 = vmatpush1.msra.mxu0 %v466
        %627 = vmatprep.subr.mxu0 0.0
        %628 = vmatpush1.msra.mxu0 %v463
        %629 = vmatprep.subr.mxu0 0.0
        %630 = vmatpush2.msra.mxu0 0.0
        %631 = vmatprep.subr.mxu0 0.0
        %632 = vmatpush2.msra.mxu0 0.0
        %633 = vmatprep.subr.mxu0 0.0
        %634 = vmatpush2.msra.mxu0 0.0
        %635 = vmatprep.subr.mxu0 0.0
        %636 = vmatpush2.msra.mxu0 0.0
        %637 = vmatprep.subr.mxu0 0.0
        %638 = vmatpush2.msra.mxu0 0.0
        %639 = vmatprep.subr.mxu0 0.0
        %640 = vmatpush2.msra.mxu0 0.0
        %641 = vmatprep.subr.mxu0 0.0
        %642 = vmatpush2.msra.mxu0 0.0
        %643 = vmatprep.subr.mxu0 0.0
        %644 = vmatpush2.msra.mxu0 0.0
        %645 = vmatprep.subr.mxu0 0.0
        %646 = vmatpush2.msra.mxu0 0.0
        %647 = vmatprep.subr.mxu0 0.0
        %648 = vmatpush2.msra.mxu0 0.0
        %649 = vmatprep.subr.mxu0 0.0
        %650 = vmatpush2.msra.mxu0 0.0
        %651 = vmatprep.subr.mxu0 0.0
        %652 = vmatpush2.msra.mxu0 0.0
        %653 = vmatprep.subr.mxu0 0.0
        %654 = vmatpush2.msra.mxu0 0.0
        %655 = vmatprep.subr.mxu0 0.0
        %656 = vmatpush2.msra.mxu0 0.0
        %657 = vmatprep.subr.mxu0 0.0
        %658 = vmatpush2.msra.mxu0 0.0
        %659 = vmatprep.subr.mxu0 0.0
        %660 = vmatpush2.msra.mxu0 0.0
        %661 = vmatprep.mubr.f32.mxu0 0.0
        %662 = vmatmul.mubr.f32.gmra.mxu0 %v460
        %v663 = vpop.f32.mrf.mxu0
        %v664 = vadd.f32 %v522, %v663
        %v665 = vpop.f32.mrf.mxu0
        %666 = vdwg.mxu0
        %667 = vmax.xlane.f32.xlu0 %v593
        %v668 = vpop.xlane.xlu0 %667
        %v669 = vsub.f32 %v593, %v668
        %v670 = vmul.f32 %v669, 1.442695
        %v671 = vpow.pop %v670
        %672 = vadd.xlane.f32.xlu0 %v671
        %v673 = vpop.xlane.xlu0 %672
        %v674 = vrcp.pop %v673
        %v675 = vmul.f32 %v671, %v674
        %676 = vst [vmem:[%s343] sm:$0xff] %v675
        %v677 = vld [vmem:[%s365] sm:$0xff]
        %v678 = vmul.f32 %v677, 1.442695
        %v679 = vpow.pop %v678
        %680 = vmax.xlane.f32.xlu0 %v595
        %v681 = vpop.xlane.xlu0 %680
        %v682 = vsub.f32 %v595, %v681
        %v683 = vmul.f32 %v682, 1.442695
        %v684 = vpow.pop %v683
        %685 = vadd.xlane.f32.xlu0 %v684
        %v686 = vpop.xlane.xlu0 %685
        %v687 = vrcp.pop %v686
        %v688 = vmul.f32 %v684, %v687
        %690 = vset.pattern.permute.xlu0 0
        %691 = vperm.xlu0 %690, %v679
        %v692 = vpop.permute.xlu0 %691
        %v694 = vmul.f32 %v692, %v688
        %695 = vst [vmem:[%s350] sm:$0xff] %v694
        %696 = vst [vmem:[%s357] sm:$0xff] %v664
        %s697 = sand.u32 %s172, 1
        %s698 = scalar_lea.sflag [#allocation4], %s697
        %s699 = sand.u32 %s172, 1
        %s700 = smul.addr %s699, 8
        %s701 = scalar_lea.vmem [#allocation7], %s700
        %s702 = sand.u32 %s28, 1
        %s703 = scalar_lea.sflag [#allocation9], %s702
        %s704 = sand.u32 %s198, 1
        %s705 = smul.addr %s704, 8
        %s706 = scalar_lea.vmem [#allocation8], %s705
        %s707 = sand.u32 %s28, 1
        %s708 = scalar_lea.sflag [#allocation9], %s707
        %s709 = sand.u32 %s224, 1
        %s710 = smul.addr %s709, 8
        %s711 = scalar_lea.vmem [#allocation10], %s710
        // Predicated region
        $region53: #{tpu_custom_call.1} parent=43 // pred_check
          %p712 = pneg %p182
        $region54: #{tpu_custom_call.1} parent=43 // pred_check_branch
          %714 = sbr.rel (%p712) target = $region56
        $region55: #{tpu_custom_call.1} parent=43 // pred_region
          %s716 = ssub.s32 128, 128
          %717 = vsyncadd %s698, %s716
          %s718 = smul.addr %s28, 128
          %s719 = scalar_lea.hbm %s6, %s718
          %s721 = sshll.u32 %s701, 4
          %s722 = int_to_ptr.vmem [resolvable:$true] %s721
          %724 = dma.vmem_to_hbm [thread:$0]  %s722, 128, %s719, %s698
        $region56: #{tpu_custom_call.1} parent=43 // pred_fallthru
          _
        // Predicated region
        $region57: #{tpu_custom_call.1} parent=43 // pred_check
          %p725 = pneg %p208
        $region58: #{tpu_custom_call.1} parent=43 // pred_check_branch
          %727 = sbr.rel (%p725) target = $region60
        $region59: #{tpu_custom_call.1} parent=43 // pred_region
          %s729 = ssub.s32 128, 128
          %730 = vsyncadd %s703, %s729
          %s731 = smul.addr %s28, 128
          %s732 = scalar_lea.hbm %s7, %s731
          %s734 = sshll.u32 %s706, 4
          %s735 = int_to_ptr.vmem [resolvable:$true] %s734
          %737 = dma.vmem_to_hbm [thread:$0]  %s735, 128, %s732, %s703
        $region60: #{tpu_custom_call.1} parent=43 // pred_fallthru
          _
        // Predicated region
        $region61: #{tpu_custom_call.1} parent=43 // pred_check
          %p738 = pneg %p234
        $region62: #{tpu_custom_call.1} parent=43 // pred_check_branch
          %740 = sbr.rel (%p738) target = $region64
        $region63: #{tpu_custom_call.1} parent=43 // pred_region
          %s742 = ssub.s32 128, 128
          %743 = vsyncadd %s708, %s742
          %s744 = smul.addr %s28, 128
          %s745 = scalar_lea.hbm %s8, %s744
          %s747 = sshll.u32 %s711, 4
          %s748 = int_to_ptr.vmem [resolvable:$true] %s747
          %750 = dma.vmem_to_hbm [thread:$0]  %s748, 128, %s745, %s708
        $region64: #{tpu_custom_call.1} parent=43 // pred_fallthru
          _
      $region44: #{tpu_custom_call.1} parent=5 // pred_fallthru
        _
      %p751 = scmp.le.s32.totalorder 2, %s23
      // Predicated region
      $region65: #{tpu_custom_call.1} parent=5 // pred_check
        %p752 = pneg %p751
      $region66: #{tpu_custom_call.1} parent=5 // pred_check_branch
        %754 = sbr.rel (%p752) target = $region68
      $region67: #{tpu_custom_call.1} parent=5 // pred_region
        %s755 = ssub.s32 %s23, 2
        // Predicated region
        $region69: #{tpu_custom_call.1} parent=67 // pred_check
          %p756 = pneg %p188
        $region70: #{tpu_custom_call.1} parent=67 // pred_check_branch
          %758 = sbr.rel (%p756) target = $region72
        $region71: #{tpu_custom_call.1} parent=67 // pred_region
          %s759 = sand.u32 %s173, 1
          %s760 = scalar_lea.sflag [#allocation4], %s759
          %s761 = sand.u32 %s173, 1
          %s762 = smul.addr %s761, 8
          %s763 = scalar_lea.vmem [#allocation7], %s762
          %764 = dma.done %s760, 128
        $region72: #{tpu_custom_call.1} parent=67 // pred_fallthru
          _
        // Predicated region
        $region73: #{tpu_custom_call.1} parent=67 // pred_check
          %p765 = pneg %p214
        $region74: #{tpu_custom_call.1} parent=67 // pred_check_branch
          %767 = sbr.rel (%p765) target = $region76
        $region75: #{tpu_custom_call.1} parent=67 // pred_region
          %s768 = sand.u32 %s29, 1
          %s769 = scalar_lea.sflag [#allocation9], %s768
          %s770 = sand.u32 %s199, 1
          %s771 = smul.addr %s770, 8
          %s772 = scalar_lea.vmem [#allocation8], %s771
          %773 = dma.done %s769, 128
        $region76: #{tpu_custom_call.1} parent=67 // pred_fallthru
          _
        // Predicated region
        $region77: #{tpu_custom_call.1} parent=67 // pred_check
          %p774 = pneg %p240
        $region78: #{tpu_custom_call.1} parent=67 // pred_check_branch
          %776 = sbr.rel (%p774) target = $region80
        $region79: #{tpu_custom_call.1} parent=67 // pred_region
          %s777 = sand.u32 %s29, 1
          %s778 = scalar_lea.sflag [#allocation9], %s777
          %s779 = sand.u32 %s225, 1
          %s780 = smul.addr %s779, 8
          %s781 = scalar_lea.vmem [#allocation10], %s780
          %782 = dma.done %s778, 128
        $region80: #{tpu_custom_call.1} parent=67 // pred_fallthru
          _
      $region68: #{tpu_custom_call.1} parent=5 // pred_fallthru
        _
    $region6: #{tpu_custom_call.1} parent=1 // loop_footer
      %s27 = sadd.s32 1, %s23
    $region7: #{tpu_custom_call.1} parent=1 // loop_footer_branch
      %22 = sbr.rel target = $region3
    $region8: #{tpu_custom_call.1} parent=1 // loop_exit
      _
    %783 = vsyncpa [#allocation3], 1
    %s784 = scalar_lea.sflag [#allocation3], 1
    %785 = vsyncpa %s784, 1
    %786 = vsyncpa [#allocation6], 1
    %787 = vsyncpa [#allocation4], 1
    %s788 = scalar_lea.sflag [#allocation4], 1
    %789 = vsyncpa %s788, 1
    %790 = vsyncpa [#allocation9], 1
    %s791 = scalar_lea.sflag [#allocation9], 1
    %792 = vsyncpa %s791, 1

</llo_original>
